<compile_context>
chip_gen: v6e
topology: v6e:2x2x1
jax: 0.10.0
libtpu: 0.0.40
codegen_flags: <defaults>
</compile_context>

<pallas_src>
import numpy as np
import jax
import jax.numpy as jnp
from jax.experimental import pallas as pl
from jax.experimental.pallas import tpu as pltpu

# ---- model hyper-params (small, consistent with the module) ----
D_MODEL = 32
D_K = 8
D_V = 8
N_HEADS = 4
D_FF = 64
LN_EPS = 1e-5

HDK = N_HEADS * D_K                    # 32
HDV = N_HEADS * D_V                    # 32
QKV_W = 3 * HDK                        # 96  ([Wq*s | Wk | Wv])
W1_COLS = QKV_W + D_MODEL + D_FF       # 192 ([Wqkv | Wo | Wconv1])
VEC_ROWS = 8
VEC_COLS = max(QKV_W, D_FF, D_MODEL)   # 96


def _layer_norm(x, gamma, beta):
    mu = jnp.mean(x, axis=-1, keepdims=True)
    var = jnp.mean((x - mu) ** 2, axis=-1, keepdims=True)
    return (x - mu) * jax.lax.rsqrt(var + LN_EPS) * gamma + beta


def encoder_layer_kernel(mask_ref, x_ref, w1_ref, w2_ref, vec_ref, out_ref, attn_ref):
    Bt, S, D = x_ref.shape
    R = Bt * S
    G = Bt * N_HEADS

    x = x_ref[...].reshape(R, D)                       # (R, 32)

    w1 = w1_ref[...]                                   # (32, 192)
    w_qkv = w1[:, :QKV_W]                              # (32, 96)
    w_o = w1[:, QKV_W:QKV_W + D_MODEL]                 # (32, 32)
    w_c1 = w1[:, QKV_W + D_MODEL:]                     # (32, 64)

    b_qkv = vec_ref[0, :QKV_W]
    b_o = vec_ref[1, :D_MODEL]
    g1 = vec_ref[2, :D_MODEL]
    be1 = vec_ref[3, :D_MODEL]
    b_c1 = vec_ref[4, :D_FF]
    b_c2 = vec_ref[5, :D_MODEL]
    g2 = vec_ref[6, :D_MODEL]
    be2 = vec_ref[7, :D_MODEL]

    # ---- fused Q/K/V projection (1/sqrt(d_k) pre-folded into the Q columns) ----
    qkv = jnp.dot(x, w_qkv, preferred_element_type=jnp.float32) + b_qkv   # (R, 96)

    def split_heads(t, dh):
        # (R, H*dh) -> (Bt*H, S, dh) using only lane slices + leading-dim stack/reshape.
        parts = [t[:, h * dh:(h + 1) * dh].reshape(Bt, S, dh) for h in range(N_HEADS)]
        return jnp.stack(parts, axis=1).reshape(G, S, dh)

    qg = split_heads(qkv[:, :HDK], D_K)                # (G, S, d_k)
    kg = split_heads(qkv[:, HDK:2 * HDK], D_K)         # (G, S, d_k)
    vg = split_heads(qkv[:, 2 * HDK:], D_V)            # (G, S, d_v)

    # ---- additive mask bias, computed once and broadcast across heads ----
    bias = jnp.where(mask_ref[...] > 0, jnp.float32(-1e9), jnp.float32(0.0))   # (Bt,S,S)
    bias = jnp.broadcast_to(bias[:, None, :, :], (Bt, N_HEADS, S, S)).reshape(G, S, S)

    # ---- scaled dot-product attention, batched over (batch*heads) ----
    scores = jnp.einsum('gqd,gkd->gqk', qg, kg,
                        preferred_element_type=jnp.float32) + bias             # (G,S,S)
    m = jnp.max(scores, axis=-1, keepdims=True)
    e = jnp.exp(scores - m)
    # exact divide: pl.reciprocal(approx=True) is not accurate enough for the 1e-4 check
    attn = e / jnp.sum(e, axis=-1, keepdims=True)                              # (G,S,S)
    attn_ref[...] = attn.reshape(Bt, N_HEADS, S, S)    # single stacked store per step

    ctx = jnp.einsum('gqk,gkd->gqd', attn, vg,
                     preferred_element_type=jnp.float32)                       # (G,S,d_v)
    ctx = ctx.reshape(Bt, N_HEADS, S, D_V)
    ctx = jnp.concatenate([ctx[:, h] for h in range(N_HEADS)], axis=-1)        # (Bt,S,H*d_v)
    ctx = ctx.reshape(R, HDV)

    mha = jnp.dot(ctx, w_o, preferred_element_type=jnp.float32) + b_o
    y = _layer_norm(mha + x, g1, be1)                                          # (R, 32)

    # ---- position-wise FFN (1x1 conv == matmul over channels) ----
    h1 = jnp.maximum(jnp.dot(y, w_c1, preferred_element_type=jnp.float32) + b_c1, 0.0)
    h2 = jnp.dot(h1, w2_ref[...], preferred_element_type=jnp.float32) + b_c2
    out_ref[...] = _layer_norm(h2 + y, g2, be2).reshape(Bt, S, D)              # single store


def pack_params(params):
    """Pack the 16 module parameters into 3 arrays (weight slab, conv2 weight, bias slab)."""
    (wq, bq, wk, bk, wv, bv, wo, bo, g1, be1,
     wc1, bc1, wc2, bc2, g2, be2) = params
    s = jnp.float32(1.0 / np.sqrt(D_K))
    w1 = jnp.concatenate([wq * s, wk, wv, wo, wc1], axis=1)        # (32, 192)
    w2 = wc2                                                       # (64, 32)

    def row(v):
        v = jnp.reshape(v, (-1,)).astype(jnp.float32)
        return jnp.pad(v, (0, VEC_COLS - v.shape[0]))

    vec = jnp.stack([
        row(jnp.concatenate([jnp.reshape(bq, (-1,)) * s,
                             jnp.reshape(bk, (-1,)),
                             jnp.reshape(bv, (-1,))])),            # fused qkv bias (96)
        row(bo), row(g1), row(be1), row(bc1), row(bc2), row(g2), row(be2),
    ])                                                             # (8, 96)
    return w1, w2, vec


def encoder_layer(enc_outputs, enc_attn_mask, packed_params, *, block_b=None):
    w1, w2, vec = packed_params
    B, S, D = enc_outputs.shape
    assert D == D_MODEL
    if block_b is None:
        # Keep >=2 parallel grid blocks when possible (v7x has 2 TensorCores) while still
        # batching several sequences' rows per step for larger B.
        block_b = B // 2 if (B % 2 == 0 and B >= 2) else B
    assert B % block_b == 0
    grid = (B // block_b,)

    in_specs = [
        pl.BlockSpec((block_b, S, S), lambda b: (b, 0, 0)),            # mask
        pl.BlockSpec((block_b, S, D), lambda b: (b, 0, 0)),            # x
        pl.BlockSpec((D_MODEL, W1_COLS), lambda b: (0, 0)),            # packed weight slab
        pl.BlockSpec((D_FF, D_MODEL), lambda b: (0, 0)),               # conv2 weight
        pl.BlockSpec((VEC_ROWS, VEC_COLS), lambda b: (0, 0)),          # packed bias/LN slab
    ]
    out_specs = [
        pl.BlockSpec((block_b, S, D), lambda b: (b, 0, 0)),
        pl.BlockSpec((block_b, N_HEADS, S, S), lambda b: (b, 0, 0, 0)),
    ]
    out_shape = [
        jax.ShapeDtypeStruct((B, S, D), jnp.float32),
        jax.ShapeDtypeStruct((B, N_HEADS, S, S), jnp.float32),
    ]

    fn = pl.pallas_call(
        encoder_layer_kernel,
        out_shape=out_shape,
        grid_spec=pltpu.PrefetchScalarGridSpec(
            num_scalar_prefetch=0,
            grid=grid,
            in_specs=in_specs,
            out_specs=out_specs,
        ),
        compiler_params=pltpu.CompilerParams(
            dimension_semantics=("parallel",)),
    )
    return fn(enc_attn_mask, enc_outputs, w1, w2, vec)


def make_params(key):
    ks = jax.random.split(key, 12)

    def w(k, shape, scale=0.1):
        return jax.random.normal(k, shape, jnp.float32) * scale

    params = [
        w(ks[0], (D_MODEL, N_HEADS * D_K)), w(ks[1], (1, N_HEADS * D_K), 0.01),
        w(ks[2], (D_MODEL, N_HEADS * D_K)), w(ks[3], (1, N_HEADS * D_K), 0.01),
        w(ks[4], (D_MODEL, N_HEADS * D_V)), w(ks[5], (1, N_HEADS * D_V), 0.01),
        w(ks[6], (N_HEADS * D_V, D_MODEL)), w(ks[7], (1, D_MODEL), 0.01),
        jnp.ones((1, D_MODEL), jnp.float32), jnp.zeros((1, D_MODEL), jnp.float32),
        w(ks[8], (D_MODEL, D_FF)), w(ks[9], (1, D_FF), 0.01),
        w(ks[10], (D_FF, D_MODEL)), w(ks[11], (1, D_MODEL), 0.01),
        jnp.ones((1, D_MODEL), jnp.float32), jnp.zeros((1, D_MODEL), jnp.float32),
    ]
    return params


def reference(x, mask, params):
    (wq, bq, wk, bk, wv, bv, wo, bo, g1, be1,
     wc1, bc1, wc2, bc2, g2, be2) = params
    B, S, D = x.shape
    q = (x @ wq + bq).reshape(B, S, N_HEADS, D_K).transpose(0, 2, 1, 3)
    k = (x @ wk + bk).reshape(B, S, N_HEADS, D_K).transpose(0, 2, 1, 3)
    v = (x @ wv + bv).reshape(B, S, N_HEADS, D_V).transpose(0, 2, 1, 3)
    scores = jnp.einsum("bhqd,bhkd->bhqk", q, k) / np.sqrt(D_K)
    scores = jnp.where(mask[:, None, :, :] > 0, -1e9, scores)
    attn = jax.nn.softmax(scores, axis=-1)
    ctx = jnp.einsum("bhqk,bhkd->bhqd", attn, v)
    ctx = ctx.transpose(0, 2, 1, 3).reshape(B, S, N_HEADS * D_V)
    y = _layer_norm(ctx @ wo + bo + x, g1[0], be1[0])
    h1 = jnp.maximum(y @ wc1 + bc1, 0.0)
    out = _layer_norm(h1 @ wc2 + bc2 + y, g2[0], be2[0])
    return out, attn


if __name__ == "__main__":
    B, S = 2, 8
    key = jax.random.PRNGKey(0)
    k_param, k_x = jax.random.split(key)
    params = make_params(k_param)
    packed = pack_params(params)
    x = jax.random.normal(k_x, (B, S, D_MODEL), jnp.float32)
    # mask the last two key positions (padding-style mask), int32 {0,1}
    mask = jnp.zeros((B, S, S), jnp.int32).at[:, :, S - 2:].set(1)

    out, attn = encoder_layer(x, mask, packed)
    jax.block_until_ready((out, attn))

    ref_out, ref_attn = reference(x, mask, params)
    np.testing.assert_allclose(np.asarray(out), np.asarray(ref_out),
                               rtol=1e-4, atol=1e-4)
    np.testing.assert_allclose(np.asarray(attn), np.asarray(ref_attn),
                               rtol=1e-4, atol=1e-4)
    print("KERNEL_OK")
</pallas_src>

<mosaic_0001>
module attributes {stable_mosaic.version = 11 : i64} {
  func.func @encoder_layer_kernel(%arg0: i32, %arg1: memref<1x8x8xi32, #tpu.memory_space<vmem>>, %arg2: memref<1x8x32xf32, #tpu.memory_space<vmem>>, %arg3: memref<32x192xf32, #tpu.memory_space<vmem>>, %arg4: memref<64x32xf32, #tpu.memory_space<vmem>>, %arg5: memref<8x96xf32, #tpu.memory_space<vmem>>, %arg6: memref<1x8x32xf32, #tpu.memory_space<vmem>>, %arg7: memref<1x4x8x8xf32, #tpu.memory_space<vmem>>) attributes {dimension_semantics = [#tpu.dimension_semantics<parallel>], iteration_bounds = array<i64: 2>, scalar_prefetch = 0 : i64, scratch_operands = 0 : i64, tpu.core_type = #tpu.core_type<tc>, window_params = [{transform_indices = @transform_0, window_bounds = array<i64: 1, 8, 8>}, {transform_indices = @transform_1, window_bounds = array<i64: 1, 8, 32>}, {pipeline_mode = #tpu.pipeline_mode<synchronous>, transform_indices = @transform_2, window_bounds = array<i64: 32, 192>}, {pipeline_mode = #tpu.pipeline_mode<synchronous>, transform_indices = @transform_3, window_bounds = array<i64: 64, 32>}, {pipeline_mode = #tpu.pipeline_mode<synchronous>, transform_indices = @transform_4, window_bounds = array<i64: 8, 96>}, {transform_indices = @transform_5, window_bounds = array<i64: 1, 8, 32>}, {transform_indices = @transform_6, window_bounds = array<i64: 1, 4, 8, 8>}]} {
    %c0 = arith.constant 0 : index
    %c0_0 = arith.constant 0 : index
    %c0_1 = arith.constant 0 : index
    %0 = vector.load %arg2[%c0, %c0_0, %c0_1] : memref<1x8x32xf32, #tpu.memory_space<vmem>>, vector<1x8x32xf32>
    %1 = vector.shape_cast %0 : vector<1x8x32xf32> to vector<8x32xf32>
    %c0_2 = arith.constant 0 : index
    %c0_3 = arith.constant 0 : index
    %2 = vector.load %arg3[%c0_2, %c0_3] : memref<32x192xf32, #tpu.memory_space<vmem>>, vector<32x192xf32>
    %3 = vector.extract_strided_slice %2 {offsets = [0, 0], sizes = [32, 96], strides = [1, 1]} : vector<32x192xf32> to vector<32x96xf32>
    %4 = vector.extract_strided_slice %2 {offsets = [0, 96], sizes = [32, 32], strides = [1, 1]} : vector<32x192xf32> to vector<32x32xf32>
    %5 = vector.extract_strided_slice %2 {offsets = [0, 128], sizes = [32, 64], strides = [1, 1]} : vector<32x192xf32> to vector<32x64xf32>
    %c0_4 = arith.constant 0 : index
    %c0_5 = arith.constant 0 : index
    %6 = vector.load %arg5[%c0_4, %c0_5] : memref<8x96xf32, #tpu.memory_space<vmem>>, vector<1x96xf32>
    %7 = vector.shape_cast %6 : vector<1x96xf32> to vector<96xf32>
    %c1 = arith.constant 1 : index
    %c0_6 = arith.constant 0 : index
    %8 = vector.load %arg5[%c1, %c0_6] : memref<8x96xf32, #tpu.memory_space<vmem>>, vector<1x32xf32>
    %9 = vector.shape_cast %8 : vector<1x32xf32> to vector<32xf32>
    %c2 = arith.constant 2 : index
    %c0_7 = arith.constant 0 : index
    %10 = vector.load %arg5[%c2, %c0_7] : memref<8x96xf32, #tpu.memory_space<vmem>>, vector<1x32xf32>
    %11 = vector.shape_cast %10 : vector<1x32xf32> to vector<32xf32>
    %c3 = arith.constant 3 : index
    %c0_8 = arith.constant 0 : index
    %12 = vector.load %arg5[%c3, %c0_8] : memref<8x96xf32, #tpu.memory_space<vmem>>, vector<1x32xf32>
    %13 = vector.shape_cast %12 : vector<1x32xf32> to vector<32xf32>
    %c4 = arith.constant 4 : index
    %c0_9 = arith.constant 0 : index
    %14 = vector.load %arg5[%c4, %c0_9] : memref<8x96xf32, #tpu.memory_space<vmem>>, vector<1x64xf32>
    %15 = vector.shape_cast %14 : vector<1x64xf32> to vector<64xf32>
    %c5 = arith.constant 5 : index
    %c0_10 = arith.constant 0 : index
    %16 = vector.load %arg5[%c5, %c0_10] : memref<8x96xf32, #tpu.memory_space<vmem>>, vector<1x32xf32>
    %17 = vector.shape_cast %16 : vector<1x32xf32> to vector<32xf32>
    %c6 = arith.constant 6 : index
    %c0_11 = arith.constant 0 : index
    %18 = vector.load %arg5[%c6, %c0_11] : memref<8x96xf32, #tpu.memory_space<vmem>>, vector<1x32xf32>
    %19 = vector.shape_cast %18 : vector<1x32xf32> to vector<32xf32>
    %c7 = arith.constant 7 : index
    %c0_12 = arith.constant 0 : index
    %20 = vector.load %arg5[%c7, %c0_12] : memref<8x96xf32, #tpu.memory_space<vmem>>, vector<1x32xf32>
    %21 = vector.shape_cast %20 : vector<1x32xf32> to vector<32xf32>
    %cst = arith.constant dense<0.000000e+00> : vector<8x96xf32>
    %22 = tpu.matmul %1, %3, %cst {dimension_numbers = #tpu.dot_dimension_numbers<[1], [0], [0], [1], [0, 0, 1, 1], [], []>} : vector<8x32xf32>, vector<32x96xf32>, vector<8x96xf32> -> vector<8x96xf32>
    %23 = vector.shape_cast %7 : vector<96xf32> to vector<1x96xf32>
    %24 = vector.broadcast %23 : vector<1x96xf32> to vector<8x96xf32>
    %25 = arith.addf %22, %24 : vector<8x96xf32>
    %26 = vector.extract_strided_slice %25 {offsets = [0, 0], sizes = [8, 32], strides = [1, 1]} : vector<8x96xf32> to vector<8x32xf32>
    %27 = vector.extract_strided_slice %26 {offsets = [0, 0], sizes = [8, 8], strides = [1, 1]} : vector<8x32xf32> to vector<8x8xf32>
    %28 = vector.shape_cast %27 : vector<8x8xf32> to vector<1x8x8xf32>
    %29 = vector.extract_strided_slice %26 {offsets = [0, 8], sizes = [8, 8], strides = [1, 1]} : vector<8x32xf32> to vector<8x8xf32>
    %30 = vector.shape_cast %29 : vector<8x8xf32> to vector<1x8x8xf32>
    %31 = vector.extract_strided_slice %26 {offsets = [0, 16], sizes = [8, 8], strides = [1, 1]} : vector<8x32xf32> to vector<8x8xf32>
    %32 = vector.shape_cast %31 : vector<8x8xf32> to vector<1x8x8xf32>
    %33 = vector.extract_strided_slice %26 {offsets = [0, 24], sizes = [8, 8], strides = [1, 1]} : vector<8x32xf32> to vector<8x8xf32>
    %34 = vector.shape_cast %33 : vector<8x8xf32> to vector<1x8x8xf32>
    %35 = vector.shape_cast %28 : vector<1x8x8xf32> to vector<1x1x8x8xf32>
    %36 = vector.shape_cast %30 : vector<1x8x8xf32> to vector<1x1x8x8xf32>
    %37 = vector.shape_cast %32 : vector<1x8x8xf32> to vector<1x1x8x8xf32>
    %38 = vector.shape_cast %34 : vector<1x8x8xf32> to vector<1x1x8x8xf32>
    %39 = tpu.concatenate %35, %36, %37, %38 in 1 : vector<1x1x8x8xf32>, vector<1x1x8x8xf32>, vector<1x1x8x8xf32>, vector<1x1x8x8xf32> -> vector<1x4x8x8xf32>
    %40 = vector.shape_cast %39 : vector<1x4x8x8xf32> to vector<4x8x8xf32>
    %41 = vector.extract_strided_slice %25 {offsets = [0, 32], sizes = [8, 32], strides = [1, 1]} : vector<8x96xf32> to vector<8x32xf32>
    %42 = vector.extract_strided_slice %41 {offsets = [0, 0], sizes = [8, 8], strides = [1, 1]} : vector<8x32xf32> to vector<8x8xf32>
    %43 = vector.shape_cast %42 : vector<8x8xf32> to vector<1x8x8xf32>
    %44 = vector.extract_strided_slice %41 {offsets = [0, 8], sizes = [8, 8], strides = [1, 1]} : vector<8x32xf32> to vector<8x8xf32>
    %45 = vector.shape_cast %44 : vector<8x8xf32> to vector<1x8x8xf32>
    %46 = vector.extract_strided_slice %41 {offsets = [0, 16], sizes = [8, 8], strides = [1, 1]} : vector<8x32xf32> to vector<8x8xf32>
    %47 = vector.shape_cast %46 : vector<8x8xf32> to vector<1x8x8xf32>
    %48 = vector.extract_strided_slice %41 {offsets = [0, 24], sizes = [8, 8], strides = [1, 1]} : vector<8x32xf32> to vector<8x8xf32>
    %49 = vector.shape_cast %48 : vector<8x8xf32> to vector<1x8x8xf32>
    %50 = vector.shape_cast %43 : vector<1x8x8xf32> to vector<1x1x8x8xf32>
    %51 = vector.shape_cast %45 : vector<1x8x8xf32> to vector<1x1x8x8xf32>
    %52 = vector.shape_cast %47 : vector<1x8x8xf32> to vector<1x1x8x8xf32>
    %53 = vector.shape_cast %49 : vector<1x8x8xf32> to vector<1x1x8x8xf32>
    %54 = tpu.concatenate %50, %51, %52, %53 in 1 : vector<1x1x8x8xf32>, vector<1x1x8x8xf32>, vector<1x1x8x8xf32>, vector<1x1x8x8xf32> -> vector<1x4x8x8xf32>
    %55 = vector.shape_cast %54 : vector<1x4x8x8xf32> to vector<4x8x8xf32>
    %56 = vector.extract_strided_slice %25 {offsets = [0, 64], sizes = [8, 32], strides = [1, 1]} : vector<8x96xf32> to vector<8x32xf32>
    %57 = vector.extract_strided_slice %56 {offsets = [0, 0], sizes = [8, 8], strides = [1, 1]} : vector<8x32xf32> to vector<8x8xf32>
    %58 = vector.shape_cast %57 : vector<8x8xf32> to vector<1x8x8xf32>
    %59 = vector.extract_strided_slice %56 {offsets = [0, 8], sizes = [8, 8], strides = [1, 1]} : vector<8x32xf32> to vector<8x8xf32>
    %60 = vector.shape_cast %59 : vector<8x8xf32> to vector<1x8x8xf32>
    %61 = vector.extract_strided_slice %56 {offsets = [0, 16], sizes = [8, 8], strides = [1, 1]} : vector<8x32xf32> to vector<8x8xf32>
    %62 = vector.shape_cast %61 : vector<8x8xf32> to vector<1x8x8xf32>
    %63 = vector.extract_strided_slice %56 {offsets = [0, 24], sizes = [8, 8], strides = [1, 1]} : vector<8x32xf32> to vector<8x8xf32>
    %64 = vector.shape_cast %63 : vector<8x8xf32> to vector<1x8x8xf32>
    %65 = vector.shape_cast %58 : vector<1x8x8xf32> to vector<1x1x8x8xf32>
    %66 = vector.shape_cast %60 : vector<1x8x8xf32> to vector<1x1x8x8xf32>
    %67 = vector.shape_cast %62 : vector<1x8x8xf32> to vector<1x1x8x8xf32>
    %68 = vector.shape_cast %64 : vector<1x8x8xf32> to vector<1x1x8x8xf32>
    %69 = tpu.concatenate %65, %66, %67, %68 in 1 : vector<1x1x8x8xf32>, vector<1x1x8x8xf32>, vector<1x1x8x8xf32>, vector<1x1x8x8xf32> -> vector<1x4x8x8xf32>
    %70 = vector.shape_cast %69 : vector<1x4x8x8xf32> to vector<4x8x8xf32>
    %c0_13 = arith.constant 0 : index
    %c0_14 = arith.constant 0 : index
    %c0_15 = arith.constant 0 : index
    %71 = vector.load %arg1[%c0_13, %c0_14, %c0_15] : memref<1x8x8xi32, #tpu.memory_space<vmem>>, vector<1x8x8xi32>
    %c0_i32 = arith.constant 0 : i32
    %72 = vector.broadcast %c0_i32 : i32 to vector<1x8x8xi32>
    %73 = arith.cmpi sgt, %71, %72 : vector<1x8x8xi32>
    %cst_16 = arith.constant -1.000000e+09 : f32
    %cst_17 = arith.constant 0.000000e+00 : f32
    %74 = vector.broadcast %cst_16 : f32 to vector<1x8x8xf32>
    %75 = vector.broadcast %cst_17 : f32 to vector<1x8x8xf32>
    %76 = arith.select %73, %74, %75 : vector<1x8x8xi1>, vector<1x8x8xf32>
    %77 = vector.shape_cast %76 : vector<1x8x8xf32> to vector<1x1x8x8xf32>
    %78 = vector.shape_cast %77 : vector<1x1x8x8xf32> to vector<1x1x8x8xf32>
    %79 = vector.broadcast %78 : vector<1x1x8x8xf32> to vector<1x4x8x8xf32>
    %80 = vector.shape_cast %79 : vector<1x4x8x8xf32> to vector<4x8x8xf32>
    "tpu.trace_start"() <{level = 10 : i32, message = "gqd,gkd->gqk"}> : () -> ()
    %cst_18 = arith.constant dense<0.000000e+00> : vector<4x8x8xf32>
    %81 = tpu.matmul %40, %55, %cst_18 {dimension_numbers = #tpu.dot_dimension_numbers<[2], [2], [1], [1], [0, 0, 0, 1, 1, 1], [0], [0]>} : vector<4x8x8xf32>, vector<4x8x8xf32>, vector<4x8x8xf32> -> vector<4x8x8xf32>
    "tpu.trace_stop"() : () -> ()
    %82 = arith.addf %81, %80 : vector<4x8x8xf32>
    %cst_19 = arith.constant dense<0xFF800000> : vector<4x8xf32>
    %83 = vector.multi_reduction <maximumf>, %82, %cst_19 [2] : vector<4x8x8xf32> to vector<4x8xf32>
    %84 = vector.shape_cast %83 : vector<4x8xf32> to vector<4x8x1xf32>
    %85 = vector.broadcast %84 : vector<4x8x1xf32> to vector<4x8x8xf32>
    %86 = arith.subf %82, %85 : vector<4x8x8xf32>
    %87 = math.exp %86 : vector<4x8x8xf32>
    %cst_20 = arith.constant dense<0.000000e+00> : vector<4x8xf32>
    %88 = vector.multi_reduction <add>, %87, %cst_20 [2] : vector<4x8x8xf32> to vector<4x8xf32>
    %89 = vector.shape_cast %88 : vector<4x8xf32> to vector<4x8x1xf32>
    %90 = vector.broadcast %89 : vector<4x8x1xf32> to vector<4x8x8xf32>
    %91 = arith.divf %87, %90 : vector<4x8x8xf32>
    %92 = vector.shape_cast %91 : vector<4x8x8xf32> to vector<1x4x8x8xf32>
    %c0_21 = arith.constant 0 : index
    %c0_22 = arith.constant 0 : index
    %c0_23 = arith.constant 0 : index
    %c0_24 = arith.constant 0 : index
    %93 = vector.load %arg7[%c0_21, %c0_22, %c0_23, %c0_24] : memref<1x4x8x8xf32, #tpu.memory_space<vmem>>, vector<1x4x8x8xf32>
    tpu.vector_store %arg7[%c0_21, %c0_22, %c0_23, %c0_24], %92 {strides = array<i32>} : memref<1x4x8x8xf32, #tpu.memory_space<vmem>>, vector<1x4x8x8xf32>,
    "tpu.trace_start"() <{level = 10 : i32, message = "gqk,gkd->gqd"}> : () -> ()
    %cst_25 = arith.constant dense<0.000000e+00> : vector<4x8x8xf32>
    %94 = tpu.matmul %91, %70, %cst_25 {dimension_numbers = #tpu.dot_dimension_numbers<[2], [1], [1], [2], [0, 0, 0, 1, 1, 2], [0], [0]>} : vector<4x8x8xf32>, vector<4x8x8xf32>, vector<4x8x8xf32> -> vector<4x8x8xf32>
    "tpu.trace_stop"() : () -> ()
    %95 = vector.shape_cast %94 : vector<4x8x8xf32> to vector<1x4x8x8xf32>
    %96 = vector.extract_strided_slice %95 {offsets = [0, 0, 0, 0], sizes = [1, 1, 8, 8], strides = [1, 1, 1, 1]} : vector<1x4x8x8xf32> to vector<1x1x8x8xf32>
    %97 = vector.shape_cast %96 : vector<1x1x8x8xf32> to vector<1x8x8xf32>
    %98 = vector.extract_strided_slice %95 {offsets = [0, 1, 0, 0], sizes = [1, 1, 8, 8], strides = [1, 1, 1, 1]} : vector<1x4x8x8xf32> to vector<1x1x8x8xf32>
    %99 = vector.shape_cast %98 : vector<1x1x8x8xf32> to vector<1x8x8xf32>
    %100 = vector.extract_strided_slice %95 {offsets = [0, 2, 0, 0], sizes = [1, 1, 8, 8], strides = [1, 1, 1, 1]} : vector<1x4x8x8xf32> to vector<1x1x8x8xf32>
    %101 = vector.shape_cast %100 : vector<1x1x8x8xf32> to vector<1x8x8xf32>
    %102 = vector.extract_strided_slice %95 {offsets = [0, 3, 0, 0], sizes = [1, 1, 8, 8], strides = [1, 1, 1, 1]} : vector<1x4x8x8xf32> to vector<1x1x8x8xf32>
    %103 = vector.shape_cast %102 : vector<1x1x8x8xf32> to vector<1x8x8xf32>
    %104 = tpu.concatenate %97, %99, %101, %103 in 2 : vector<1x8x8xf32>, vector<1x8x8xf32>, vector<1x8x8xf32>, vector<1x8x8xf32> -> vector<1x8x32xf32>
    %105 = vector.shape_cast %104 : vector<1x8x32xf32> to vector<8x32xf32>
    %cst_26 = arith.constant dense<0.000000e+00> : vector<8x32xf32>
    %106 = tpu.matmul %105, %4, %cst_26 {dimension_numbers = #tpu.dot_dimension_numbers<[1], [0], [0], [1], [0, 0, 1, 1], [], []>} : vector<8x32xf32>, vector<32x32xf32>, vector<8x32xf32> -> vector<8x32xf32>
    %107 = vector.shape_cast %9 : vector<32xf32> to vector<1x32xf32>
    %108 = vector.broadcast %107 : vector<1x32xf32> to vector<8x32xf32>
    %109 = arith.addf %106, %108 : vector<8x32xf32>
    %110 = arith.addf %109, %1 : vector<8x32xf32>
    %cst_27 = arith.constant dense<0.000000e+00> : vector<8xf32>
    %111 = vector.multi_reduction <add>, %110, %cst_27 [1] : vector<8x32xf32> to vector<8xf32>
    %112 = vector.shape_cast %111 : vector<8xf32> to vector<8x1xf32>
    %cst_28 = arith.constant 3.200000e+01 : f32
    %113 = vector.broadcast %cst_28 : f32 to vector<8x1xf32>
    %114 = arith.divf %112, %113 : vector<8x1xf32>
    %115 = vector.broadcast %114 : vector<8x1xf32> to vector<8x32xf32>
    %116 = arith.subf %110, %115 : vector<8x32xf32>
    %117 = arith.mulf %116, %116 : vector<8x32xf32>
    %cst_29 = arith.constant dense<0.000000e+00> : vector<8xf32>
    %118 = vector.multi_reduction <add>, %117, %cst_29 [1] : vector<8x32xf32> to vector<8xf32>
    %119 = vector.shape_cast %118 : vector<8xf32> to vector<8x1xf32>
    %cst_30 = arith.constant 3.200000e+01 : f32
    %120 = vector.broadcast %cst_30 : f32 to vector<8x1xf32>
    %121 = arith.divf %119, %120 : vector<8x1xf32>
    %122 = vector.broadcast %114 : vector<8x1xf32> to vector<8x32xf32>
    %123 = arith.subf %110, %122 : vector<8x32xf32>
    %cst_31 = arith.constant 9.99999974E-6 : f32
    %124 = vector.broadcast %cst_31 : f32 to vector<8x1xf32>
    %125 = arith.addf %121, %124 : vector<8x1xf32>
    %126 = math.rsqrt %125 : vector<8x1xf32>
    %127 = vector.broadcast %126 : vector<8x1xf32> to vector<8x32xf32>
    %128 = arith.mulf %123, %127 : vector<8x32xf32>
    %129 = vector.shape_cast %11 : vector<32xf32> to vector<1x32xf32>
    %130 = vector.broadcast %129 : vector<1x32xf32> to vector<8x32xf32>
    %131 = arith.mulf %128, %130 : vector<8x32xf32>
    %132 = vector.shape_cast %13 : vector<32xf32> to vector<1x32xf32>
    %133 = vector.broadcast %132 : vector<1x32xf32> to vector<8x32xf32>
    %134 = arith.addf %131, %133 : vector<8x32xf32>
    %cst_32 = arith.constant dense<0.000000e+00> : vector<8x64xf32>
    %135 = tpu.matmul %134, %5, %cst_32 {dimension_numbers = #tpu.dot_dimension_numbers<[1], [0], [0], [1], [0, 0, 1, 1], [], []>} : vector<8x32xf32>, vector<32x64xf32>, vector<8x64xf32> -> vector<8x64xf32>
    %136 = vector.shape_cast %15 : vector<64xf32> to vector<1x64xf32>
    %137 = vector.broadcast %136 : vector<1x64xf32> to vector<8x64xf32>
    %138 = arith.addf %135, %137 : vector<8x64xf32>
    %cst_33 = arith.constant 0.000000e+00 : f32
    %139 = vector.broadcast %cst_33 : f32 to vector<8x64xf32>
    %140 = arith.maximumf %138, %139 : vector<8x64xf32>
    %c0_34 = arith.constant 0 : index
    %c0_35 = arith.constant 0 : index
    %141 = vector.load %arg4[%c0_34, %c0_35] : memref<64x32xf32, #tpu.memory_space<vmem>>, vector<64x32xf32>
    %cst_36 = arith.constant dense<0.000000e+00> : vector<8x32xf32>
    %142 = tpu.matmul %140, %141, %cst_36 {dimension_numbers = #tpu.dot_dimension_numbers<[1], [0], [0], [1], [0, 0, 1, 1], [], []>} : vector<8x64xf32>, vector<64x32xf32>, vector<8x32xf32> -> vector<8x32xf32>
    %143 = vector.shape_cast %17 : vector<32xf32> to vector<1x32xf32>
    %144 = vector.broadcast %143 : vector<1x32xf32> to vector<8x32xf32>
    %145 = arith.addf %142, %144 : vector<8x32xf32>
    %146 = arith.addf %145, %134 : vector<8x32xf32>
    %cst_37 = arith.constant dense<0.000000e+00> : vector<8xf32>
    %147 = vector.multi_reduction <add>, %146, %cst_37 [1] : vector<8x32xf32> to vector<8xf32>
    %148 = vector.shape_cast %147 : vector<8xf32> to vector<8x1xf32>
    %cst_38 = arith.constant 3.200000e+01 : f32
    %149 = vector.broadcast %cst_38 : f32 to vector<8x1xf32>
    %150 = arith.divf %148, %149 : vector<8x1xf32>
    %151 = vector.broadcast %150 : vector<8x1xf32> to vector<8x32xf32>
    %152 = arith.subf %146, %151 : vector<8x32xf32>
    %153 = arith.mulf %152, %152 : vector<8x32xf32>
    %cst_39 = arith.constant dense<0.000000e+00> : vector<8xf32>
    %154 = vector.multi_reduction <add>, %153, %cst_39 [1] : vector<8x32xf32> to vector<8xf32>
    %155 = vector.shape_cast %154 : vector<8xf32> to vector<8x1xf32>
    %cst_40 = arith.constant 3.200000e+01 : f32
    %156 = vector.broadcast %cst_40 : f32 to vector<8x1xf32>
    %157 = arith.divf %155, %156 : vector<8x1xf32>
    %158 = vector.broadcast %150 : vector<8x1xf32> to vector<8x32xf32>
    %159 = arith.subf %146, %158 : vector<8x32xf32>
    %cst_41 = arith.constant 9.99999974E-6 : f32
    %160 = vector.broadcast %cst_41 : f32 to vector<8x1xf32>
    %161 = arith.addf %157, %160 : vector<8x1xf32>
    %162 = math.rsqrt %161 : vector<8x1xf32>
    %163 = vector.broadcast %162 : vector<8x1xf32> to vector<8x32xf32>
    %164 = arith.mulf %159, %163 : vector<8x32xf32>
    %165 = vector.shape_cast %19 : vector<32xf32> to vector<1x32xf32>
    %166 = vector.broadcast %165 : vector<1x32xf32> to vector<8x32xf32>
    %167 = arith.mulf %164, %166 : vector<8x32xf32>
    %168 = vector.shape_cast %21 : vector<32xf32> to vector<1x32xf32>
    %169 = vector.broadcast %168 : vector<1x32xf32> to vector<8x32xf32>
    %170 = arith.addf %167, %169 : vector<8x32xf32>
    %171 = vector.shape_cast %170 : vector<8x32xf32> to vector<1x8x32xf32>
    %c0_42 = arith.constant 0 : index
    %c0_43 = arith.constant 0 : index
    %c0_44 = arith.constant 0 : index
    %172 = vector.load %arg6[%c0_42, %c0_43, %c0_44] : memref<1x8x32xf32, #tpu.memory_space<vmem>>, vector<1x8x32xf32>
    tpu.vector_store %arg6[%c0_42, %c0_43, %c0_44], %171 {strides = array<i32>} : memref<1x8x32xf32, #tpu.memory_space<vmem>>, vector<1x8x32xf32>,
    return
  }
  func.func @transform_0(%arg0: i32) -> (i32, i32, i32) {
    %c0_i32 = arith.constant 0 : i32
    %c0_i32_0 = arith.constant 0 : i32
    %c0_i32_1 = arith.constant 0 : i32
    return %arg0, %c0_i32, %c0_i32_0 : i32, i32, i32
  }
  func.func @transform_1(%arg0: i32) -> (i32, i32, i32) {
    %c0_i32 = arith.constant 0 : i32
    %c0_i32_0 = arith.constant 0 : i32
    %c0_i32_1 = arith.constant 0 : i32
    return %arg0, %c0_i32, %c0_i32_0 : i32, i32, i32
  }
  func.func @transform_2(%arg0: i32) -> (i32, i32) {
    %c0_i32 = arith.constant 0 : i32
    %c0_i32_0 = arith.constant 0 : i32
    %c0_i32_1 = arith.constant 0 : i32
    return %c0_i32, %c0_i32_0 : i32, i32
  }
  func.func @transform_3(%arg0: i32) -> (i32, i32) {
    %c0_i32 = arith.constant 0 : i32
    %c0_i32_0 = arith.constant 0 : i32
    %c0_i32_1 = arith.constant 0 : i32
    return %c0_i32, %c0_i32_0 : i32, i32
  }
  func.func @transform_4(%arg0: i32) -> (i32, i32) {
    %c0_i32 = arith.constant 0 : i32
    %c0_i32_0 = arith.constant 0 : i32
    %c0_i32_1 = arith.constant 0 : i32
    return %c0_i32, %c0_i32_0 : i32, i32
  }
  func.func @transform_5(%arg0: i32) -> (i32, i32, i32) {
    %c0_i32 = arith.constant 0 : i32
    %c0_i32_0 = arith.constant 0 : i32
    %c0_i32_1 = arith.constant 0 : i32
    return %arg0, %c0_i32, %c0_i32_0 : i32, i32, i32
  }
  func.func @transform_6(%arg0: i32) -> (i32, i32, i32, i32) {
    %c0_i32 = arith.constant 0 : i32
    %c0_i32_0 = arith.constant 0 : i32
    %c0_i32_1 = arith.constant 0 : i32
    %c0_i32_2 = arith.constant 0 : i32
    return %arg0, %c0_i32, %c0_i32_0, %c0_i32_1 : i32, i32, i32, i32
  }
}

</mosaic_0001>

<llo_original>
// kernel: tpu_custom_call.1
$region0: #{tpu_custom_call.1}
  #allocation0 [shape = 'u32[]', space=smem, size = 0x4, offset = 0x4, fixed_abs, tag = 'smem constant byte address 0x4 - core index']
  #allocation1 [shape = 'u32[144,128]{1,0:T(1,128)}', space=vmem, size = 0x12000, scoped, tag = 'internal scratch']
  %s0 = inlined_call_operand.vmem [shape: s32[2,8,8], index: 0, kind: input, shape index: {}]
  %s1 = inlined_call_operand.vmem [shape: f32[2,8,32], index: 1, kind: input, shape index: {}]
  %s2 = inlined_call_operand.vmem [shape: f32[32,192], index: 2, kind: input, shape index: {}]
  %s3 = inlined_call_operand.vmem [shape: f32[64,32], index: 3, kind: input, shape index: {}]
  %s4 = inlined_call_operand.hbm [shape: f32[8,96], index: 4, kind: input, shape index: {}]
  %s5 = inlined_call_operand.hbm [shape: f32[2,8,32], index: 5, kind: output, shape index: {0}]
  %s6 = inlined_call_operand.hbm [shape: f32[2,4,8,8], index: 6, kind: output, shape index: {1}]
  %7 = xla_tuple %s5, %s6
  %s8 = sld [smem:[#allocation0]]
  $region65: #{tpu_custom_call.1} parent=0
    _
  %s10 = ssub.s32 1, %s8
  %s11 = scalar_select 0, %s10, %s8
  $region1: #{tpu_custom_call.1} parent=0
    #allocation2 [shape = 'u8[4096]{0}', space=vmem, size = 0x1000, scoped, tag = 'input window, operand 4, single buffered']
    #allocation3 [shape = 's32[2]{0}', space=sflag, size = 0x8, scoped, tag = 'scoped memory for tpu_custom_call.1']
    #allocation4 [shape = 's32[2]{0}', space=sflag, size = 0x8, scoped, tag = 'scoped memory for tpu_custom_call.1']
    #allocation5 [shape = 'u8[8192]{0}', space=vmem, size = 0x2000, scoped, tag = 'output window, operand 0']
    #allocation6 [shape = 'u8[32768]{0}', space=vmem, size = 0x8000, scoped, tag = 'output window, operand 1']
    #allocation7 [shape = 's32[2]{0}', space=sflag, size = 0x8, scoped, tag = 'scoped memory for tpu_custom_call.1']
    %12 = vsyncpa [#allocation3], 0
    %13 = vsyncpa [#allocation4], 0
    %s14 = scalar_lea.sflag [#allocation4], 1
    %15 = vsyncpa %s14, 0
    %16 = vsyncpa [#allocation7], 0
    %s17 = scalar_lea.sflag [#allocation7], 1
    %18 = vsyncpa %s17, 0
    loop: start=0, step=1, limit=4
    $region2: #{tpu_custom_call.1} parent=1 // loop_pre_header
      _
    $region3: #{tpu_custom_call.1} parent=1 // loop_header
      %s20 = sphi 0, %s24
      %p21 = scmp.ge.s32.totalorder %s20, 4
      %s30 = sphi 0, %s32
      %s33 = sphi 0, %s30
      %s34 = sphi 0, %s33
      %s50 = sphi 0, %s34
      %s56 = sphi 0, %s58
      %s59 = sphi 0, %s56
      %s60 = sphi 0, %s59
      %s76 = sphi 0, %s60
      %s80 = sphi 0, %s80
      %s82 = sphi 0, %s80
      %s83 = sphi 0, %s82
      %s97 = sphi 0, %s83
      %s101 = sphi 0, %s101
      %s103 = sphi 0, %s101
      %s104 = sphi 0, %s103
      %s118 = sphi 0, %s104
      %s122 = sphi 0, %s122
      %s124 = sphi 0, %s122
      %s125 = sphi 0, %s124
      %s139 = sphi 0, %s125
      %s145 = sphi 0, %s147
      %s148 = sphi 0, %s145
      %s149 = sphi 0, %s148
      %s165 = sphi 0, %s149
      %s171 = sphi 0, %s173
      %s174 = sphi 0, %s171
      %s175 = sphi 0, %s174
      %s191 = sphi 0, %s175
    $region4: #{tpu_custom_call.1} parent=1 // loop_header_branch
      %23 = sbr.rel (%p21) target = $region8
    $region5: #{tpu_custom_call.1} parent=1 // loop_body
      %s25 = ssub.s32 %s20, 1
      %s26 = ssub.s32 %s20, 2
      %s27 = sadd.s32 %s20, 1
      %s28 = ssub.s32 %s20, %s27
      %p29 = scmp.eq.s32.totalorder %s28, 0
      %s31 = sadd.s32 %s30, 1
      %s32 = scalar_select %p29, %s30, %s31
      %p35 = pneg %p29
      %p36 = scmp.eq.s32.totalorder %s20, 1
      %p37 = por %p35, %p36
      %p38 = scmp.ne.s32.totalorder %s30, %s33
      %p39 = scmp.eq.s32.totalorder %s20, 0
      %p40 = por %p38, %p39
      %p41 = scmp.ne.s32.totalorder %s30, %s33
      %p42 = scmp.eq.s32.totalorder %s25, 1
      %p43 = por %p41, %p42
      %p44 = scmp.ne.s32.totalorder %s33, %s34
      %p45 = scmp.eq.s32.totalorder %s25, 0
      %p46 = por %p44, %p45
      %p47 = scmp.ne.s32.totalorder %s33, %s34
      %p48 = scmp.eq.s32.totalorder %s26, 1
      %p49 = por %p47, %p48
      %p51 = scmp.ne.s32.totalorder %s34, %s50
      %p52 = scmp.eq.s32.totalorder %s26, 0
      %p53 = por %p51, %p52
      %s54 = ssub.s32 %s20, %s27
      %p55 = scmp.eq.s32.totalorder %s54, 0
      %s57 = sadd.s32 %s56, 1
      %s58 = scalar_select %p55, %s56, %s57
      %p61 = pneg %p55
      %p62 = scmp.eq.s32.totalorder %s20, 1
      %p63 = por %p61, %p62
      %p64 = scmp.ne.s32.totalorder %s56, %s59
      %p65 = scmp.eq.s32.totalorder %s20, 0
      %p66 = por %p64, %p65
      %p67 = scmp.ne.s32.totalorder %s56, %s59
      %p68 = scmp.eq.s32.totalorder %s25, 1
      %p69 = por %p67, %p68
      %p70 = scmp.ne.s32.totalorder %s59, %s60
      %p71 = scmp.eq.s32.totalorder %s25, 0
      %p72 = por %p70, %p71
      %p73 = scmp.ne.s32.totalorder %s59, %s60
      %p74 = scmp.eq.s32.totalorder %s26, 1
      %p75 = por %p73, %p74
      %p77 = scmp.ne.s32.totalorder %s60, %s76
      %p78 = scmp.eq.s32.totalorder %s26, 0
      %p79 = por %p77, %p78
      %s81 = sadd.s32 %s80, 1
      %p84 = scmp.eq.s32.totalorder %s20, 1
      %p85 = scmp.ne.s32.totalorder %s80, %s82
      %p86 = scmp.eq.s32.totalorder %s20, 0
      %p87 = por %p85, %p86
      %p88 = scmp.ne.s32.totalorder %s80, %s82
      %p89 = scmp.eq.s32.totalorder %s25, 1
      %p90 = por %p88, %p89
      %p91 = scmp.ne.s32.totalorder %s82, %s83
      %p92 = scmp.eq.s32.totalorder %s25, 0
      %p93 = por %p91, %p92
      %p94 = scmp.ne.s32.totalorder %s82, %s83
      %p95 = scmp.eq.s32.totalorder %s26, 1
      %p96 = por %p94, %p95
      %p98 = scmp.ne.s32.totalorder %s83, %s97
      %p99 = scmp.eq.s32.totalorder %s26, 0
      %p100 = por %p98, %p99
      %s102 = sadd.s32 %s101, 1
      %p105 = scmp.eq.s32.totalorder %s20, 1
      %p106 = scmp.ne.s32.totalorder %s101, %s103
      %p107 = scmp.eq.s32.totalorder %s20, 0
      %p108 = por %p106, %p107
      %p109 = scmp.ne.s32.totalorder %s101, %s103
      %p110 = scmp.eq.s32.totalorder %s25, 1
      %p111 = por %p109, %p110
      %p112 = scmp.ne.s32.totalorder %s103, %s104
      %p113 = scmp.eq.s32.totalorder %s25, 0
      %p114 = por %p112, %p113
      %p115 = scmp.ne.s32.totalorder %s103, %s104
      %p116 = scmp.eq.s32.totalorder %s26, 1
      %p117 = por %p115, %p116
      %p119 = scmp.ne.s32.totalorder %s104, %s118
      %p120 = scmp.eq.s32.totalorder %s26, 0
      %p121 = por %p119, %p120
      %s123 = sadd.s32 %s122, 1
      %p126 = scmp.eq.s32.totalorder %s20, 1
      %p127 = scmp.ne.s32.totalorder %s122, %s124
      %p128 = scmp.eq.s32.totalorder %s20, 0
      %p129 = por %p127, %p128
      %p130 = scmp.ne.s32.totalorder %s122, %s124
      %p131 = scmp.eq.s32.totalorder %s25, 1
      %p132 = por %p130, %p131
      %p133 = scmp.ne.s32.totalorder %s124, %s125
      %p134 = scmp.eq.s32.totalorder %s25, 0
      %p135 = por %p133, %p134
      %p136 = scmp.ne.s32.totalorder %s124, %s125
      %p137 = scmp.eq.s32.totalorder %s26, 1
      %p138 = por %p136, %p137
      %p140 = scmp.ne.s32.totalorder %s125, %s139
      %p141 = scmp.eq.s32.totalorder %s26, 0
      %p142 = por %p140, %p141
      %s143 = ssub.s32 %s20, %s27
      %p144 = scmp.eq.s32.totalorder %s143, 0
      %s146 = sadd.s32 %s145, 1
      %s147 = scalar_select %p144, %s145, %s146
      %p150 = pneg %p144
      %p151 = scmp.eq.s32.totalorder %s20, 1
      %p152 = por %p150, %p151
      %p153 = scmp.ne.s32.totalorder %s145, %s148
      %p154 = scmp.eq.s32.totalorder %s20, 0
      %p155 = por %p153, %p154
      %p156 = scmp.ne.s32.totalorder %s145, %s148
      %p157 = scmp.eq.s32.totalorder %s25, 1
      %p158 = por %p156, %p157
      %p159 = scmp.ne.s32.totalorder %s148, %s149
      %p160 = scmp.eq.s32.totalorder %s25, 0
      %p161 = por %p159, %p160
      %p162 = scmp.ne.s32.totalorder %s148, %s149
      %p163 = scmp.eq.s32.totalorder %s26, 1
      %p164 = por %p162, %p163
      %p166 = scmp.ne.s32.totalorder %s149, %s165
      %p167 = scmp.eq.s32.totalorder %s26, 0
      %p168 = por %p166, %p167
      %s169 = ssub.s32 %s20, %s27
      %p170 = scmp.eq.s32.totalorder %s169, 0
      %s172 = sadd.s32 %s171, 1
      %s173 = scalar_select %p170, %s171, %s172
      %p176 = pneg %p170
      %p177 = scmp.eq.s32.totalorder %s20, 1
      %p178 = por %p176, %p177
      %p179 = scmp.ne.s32.totalorder %s171, %s174
      %p180 = scmp.eq.s32.totalorder %s20, 0
      %p181 = por %p179, %p180
      %p182 = scmp.ne.s32.totalorder %s171, %s174
      %p183 = scmp.eq.s32.totalorder %s25, 1
      %p184 = por %p182, %p183
      %p185 = scmp.ne.s32.totalorder %s174, %s175
      %p186 = scmp.eq.s32.totalorder %s25, 0
      %p187 = por %p185, %p186
      %p188 = scmp.ne.s32.totalorder %s174, %s175
      %p189 = scmp.eq.s32.totalorder %s26, 1
      %p190 = por %p188, %p189
      %p192 = scmp.ne.s32.totalorder %s175, %s191
      %p193 = scmp.eq.s32.totalorder %s26, 0
      %p194 = por %p192, %p193
      %p195 = scmp.le.s32.totalorder 1, %s20
      %p196 = scmp.lt.s32.totalorder %s20, 3
      %p197 = pnand %p195, %p196
      %p198 = pneg %p197
      // Predicated region
      $region9: #{tpu_custom_call.1} parent=5 // pred_check
        _
      $region10: #{tpu_custom_call.1} parent=5 // pred_check_branch
        %200 = sbr.rel (%p197) target = $region12
      $region11: #{tpu_custom_call.1} parent=5 // pred_region
        %s201 = ssub.s32 %s20, 1
        // Predicated region
        $region13: #{tpu_custom_call.1} parent=11 // pred_check
          %p202 = pneg %p93
        $region14: #{tpu_custom_call.1} parent=11 // pred_check_branch
          %204 = sbr.rel (%p202) target = $region16
        $region15: #{tpu_custom_call.1} parent=11 // pred_region
          _
        $region16: #{tpu_custom_call.1} parent=11 // pred_fallthru
          _
        // Predicated region
        $region17: #{tpu_custom_call.1} parent=11 // pred_check
          %p205 = pneg %p114
        $region18: #{tpu_custom_call.1} parent=11 // pred_check_branch
          %207 = sbr.rel (%p205) target = $region20
        $region19: #{tpu_custom_call.1} parent=11 // pred_region
          _
        $region20: #{tpu_custom_call.1} parent=11 // pred_fallthru
          _
        // Predicated region
        $region21: #{tpu_custom_call.1} parent=11 // pred_check
          %p208 = pneg %p135
        $region22: #{tpu_custom_call.1} parent=11 // pred_check_branch
          %210 = sbr.rel (%p208) target = $region24
        $region23: #{tpu_custom_call.1} parent=11 // pred_region
          %s212 = ssub.s32 128, 128
          %213 = vsyncadd [#allocation3], %s212
          %s215 = sshll.u32 [#allocation2], 4
          %s216 = int_to_ptr.vmem [resolvable:$true] %s215
          %218 = dma.hbm_to_vmem [thread:$0]  %s4, 128, %s216, [#allocation3]
        $region24: #{tpu_custom_call.1} parent=11 // pred_fallthru
          _
      $region12: #{tpu_custom_call.1} parent=5 // pred_fallthru
        _
      %p219 = scmp.lt.s32.totalorder %s20, 2
      // Predicated region
      $region25: #{tpu_custom_call.1} parent=5 // pred_check
        %p220 = pneg %p219
      $region26: #{tpu_custom_call.1} parent=5 // pred_check_branch
        %222 = sbr.rel (%p220) target = $region28
      $region27: #{tpu_custom_call.1} parent=5 // pred_region
        // Predicated region
        $region29: #{tpu_custom_call.1} parent=27 // pred_check
          %p223 = pneg %p40
        $region30: #{tpu_custom_call.1} parent=27 // pred_check_branch
          %225 = sbr.rel (%p223) target = $region32
        $region31: #{tpu_custom_call.1} parent=27 // pred_region
          %p226 = scmp.lt.s32.totalorder %s20, 1
          %s227 = scalar_select %p226, %s20, 1
          %s228 = smul.addr %s227, 8
          %s229 = scalar_lea.vmem %s0, %s228
        $region32: #{tpu_custom_call.1} parent=27 // pred_fallthru
          _
        // Predicated region
        $region33: #{tpu_custom_call.1} parent=27 // pred_check
          %p230 = pneg %p66
        $region34: #{tpu_custom_call.1} parent=27 // pred_check_branch
          %232 = sbr.rel (%p230) target = $region36
        $region35: #{tpu_custom_call.1} parent=27 // pred_region
          %p233 = scmp.lt.s32.totalorder %s20, 1
          %s234 = scalar_select %p233, %s20, 1
          %s235 = smul.addr %s234, 8
          %s236 = scalar_lea.vmem %s1, %s235
        $region36: #{tpu_custom_call.1} parent=27 // pred_fallthru
          _
      $region28: #{tpu_custom_call.1} parent=5 // pred_fallthru
        _
      %p237 = scmp.le.s32.totalorder 1, %s20
      %p238 = scmp.lt.s32.totalorder %s20, 3
      %p239 = pnand %p237, %p238
      %p240 = pneg %p239
      // Predicated region
      $region37: #{tpu_custom_call.1} parent=5 // pred_check
        _
      $region38: #{tpu_custom_call.1} parent=5 // pred_check_branch
        %242 = sbr.rel (%p239) target = $region40
      $region39: #{tpu_custom_call.1} parent=5 // pred_region
        %s243 = ssub.s32 %s20, 1
        // Predicated region
        $region41: #{tpu_custom_call.1} parent=39 // pred_check
          %p244 = pneg %p135
        $region42: #{tpu_custom_call.1} parent=39 // pred_check_branch
          %246 = sbr.rel (%p244) target = $region44
        $region43: #{tpu_custom_call.1} parent=39 // pred_region
          %247 = dma.done [#allocation3], 128
        $region44: #{tpu_custom_call.1} parent=39 // pred_fallthru
          _
        %p248 = scmp.lt.s32.totalorder %s25, 1
        %s249 = scalar_select %p248, %s25, 1
        %s250 = smul.addr %s249, 8
        %s251 = scalar_lea.vmem %s0, %s250
        %p252 = pneg %p46
        %p253 = pneg %p43
        %p254 = scmp.lt.s32.totalorder %s25, 1
        %s255 = scalar_select %p254, %s25, 1
        %s256 = smul.addr %s255, 8
        %s257 = scalar_lea.vmem %s1, %s256
        %p258 = pneg %p72
        %p259 = pneg %p69
        %p260 = pneg %p93
        %p261 = pneg %p90
        %p262 = pneg %p114
        %p263 = pneg %p111
        %p264 = pneg %p135
        %p265 = pneg %p132
        %p266 = pneg %p161
        %p267 = pneg %p158
        %s268 = sand.u32 %s148, 1
        %s269 = scalar_lea.sflag [#allocation4], %s268
        %s270 = sand.u32 %s148, 1
        %s271 = smul.addr %s270, 8
        %s272 = scalar_lea.vmem [#allocation5], %s271
        %p273 = pneg %p187
        %p274 = pneg %p184
        %s275 = sand.u32 %s174, 1
        %s276 = scalar_lea.sflag [#allocation7], %s275
        %s277 = sand.u32 %s174, 1
        %s278 = smul.addr %s277, 32
        %s279 = scalar_lea.vmem [#allocation6], %s278
        %p280 = scmp.lt.s32.totalorder %s25, 1
        %s281 = scalar_select %p280, %s25, 1
        %s282 = smul.addr %s281, 8
        %s283 = scalar_lea.vmem %s0, %s282
        %p284 = scmp.lt.s32.totalorder %s25, 1
        %s285 = scalar_select %p284, %s25, 1
        %s286 = smul.addr %s285, 8
        %s287 = scalar_lea.vmem %s1, %s286
        %v288 = vld [vmem:[%s287] sm:$0xff]
        %v289 = vld [vmem:[%s2] sm:$0xff]
        %v290 = vld [vmem:[%s2 + $0x8] sm:$0xff]
        %v291 = vld [vmem:[%s2 + $0x10] sm:$0xff]
        %v292 = vld [vmem:[%s2 + $0x18] sm:$0xff]
        %v293 = vld [vmem:[%s2 + $0x20] sm:$0xff]
        %v294 = vld [vmem:[%s2 + $0x28] sm:$0xff]
        %v295 = vld [vmem:[%s2 + $0x30] sm:$0xff]
        %v296 = vld [vmem:[%s2 + $0x38] sm:$0xff]
        %v297 = vld [vmem:[#allocation2] sm:$0x1]
        %v298 = vld [vmem:[#allocation2 + $0x1] sm:$0x1]
        %v299 = vld [vmem:[#allocation2 + $0x2] sm:$0x1]
        %v300 = vld [vmem:[#allocation2 + $0x3] sm:$0x1]
        %v301 = vld [vmem:[#allocation2 + $0x4] sm:$0x1]
        %v302 = vld [vmem:[#allocation2 + $0x5] sm:$0x1]
        %v303 = vld [vmem:[#allocation2 + $0x6] sm:$0x1]
        %v304 = vld [vmem:[#allocation2 + $0x7] sm:$0x1]
        %v305 = vlaneseq
        %v306 = vshrl.u32 %v305, 7
        %v307 = vsub.s32 0, %v306
        %v308 = vrot.slane %v297, %v307
        %vm309 = vcmask 261120
        %v311 = vsel %vm309, %v288, 0
        %313 = vmatprep.subr.mxu0 0.0
        %314 = vmatpush1.msra.mxu0 0.0
        %315 = vmatprep.subr.mxu0 0.0
        %316 = vmatpush1.msra.mxu0 0.0
        %317 = vmatprep.subr.mxu0 0.0
        %318 = vmatpush1.msra.mxu0 0.0
        %319 = vmatprep.subr.mxu0 0.0
        %320 = vmatpush1.msra.mxu0 0.0
        %321 = vmatprep.subr.mxu0 0.0
        %322 = vmatpush1.msra.mxu0 0.0
        %323 = vmatprep.subr.mxu0 0.0
        %324 = vmatpush1.msra.mxu0 0.0
        %325 = vmatprep.subr.mxu0 0.0
        %326 = vmatpush1.msra.mxu0 0.0
        %327 = vmatprep.subr.mxu0 0.0
        %328 = vmatpush1.msra.mxu0 0.0
        %329 = vmatprep.subr.mxu0 0.0
        %330 = vmatpush1.msra.mxu0 0.0
        %331 = vmatprep.subr.mxu0 0.0
        %332 = vmatpush1.msra.mxu0 0.0
        %333 = vmatprep.subr.mxu0 0.0
        %334 = vmatpush1.msra.mxu0 0.0
        %335 = vmatprep.subr.mxu0 0.0
        %336 = vmatpush1.msra.mxu0 0.0
        %337 = vmatprep.subr.mxu0 0.0
        %338 = vmatpush1.msra.mxu0 %v295
        %339 = vmatprep.subr.mxu0 0.0
        %340 = vmatpush1.msra.mxu0 %v293
        %341 = vmatprep.subr.mxu0 0.0
        %342 = vmatpush1.msra.mxu0 %v291
        %343 = vmatprep.subr.mxu0 0.0
        %344 = vmatpush1.msra.mxu0 %v289
        %345 = vmatprep.subr.mxu0 0.0
        %346 = vmatpush2.msra.mxu0 0.0
        %347 = vmatprep.subr.mxu0 0.0
        %348 = vmatpush2.msra.mxu0 0.0
        %349 = vmatprep.subr.mxu0 0.0
        %350 = vmatpush2.msra.mxu0 0.0
        %351 = vmatprep.subr.mxu0 0.0
        %352 = vmatpush2.msra.mxu0 0.0
        %353 = vmatprep.subr.mxu0 0.0
        %354 = vmatpush2.msra.mxu0 0.0
        %355 = vmatprep.subr.mxu0 0.0
        %356 = vmatpush2.msra.mxu0 0.0
        %357 = vmatprep.subr.mxu0 0.0
        %358 = vmatpush2.msra.mxu0 0.0
        %359 = vmatprep.subr.mxu0 0.0
        %360 = vmatpush2.msra.mxu0 0.0
        %361 = vmatprep.subr.mxu0 0.0
        %362 = vmatpush2.msra.mxu0 0.0
        %363 = vmatprep.subr.mxu0 0.0
        %364 = vmatpush2.msra.mxu0 0.0
        %365 = vmatprep.subr.mxu0 0.0
        %366 = vmatpush2.msra.mxu0 0.0
        %367 = vmatprep.subr.mxu0 0.0
        %368 = vmatpush2.msra.mxu0 0.0
        %369 = vmatprep.subr.mxu0 0.0
        %370 = vmatpush2.msra.mxu0 0.0
        %371 = vmatprep.subr.mxu0 0.0
        %372 = vmatpush2.msra.mxu0 0.0
        %373 = vmatprep.subr.mxu0 0.0
        %374 = vmatpush2.msra.mxu0 0.0
        %375 = vmatprep.subr.mxu0 0.0
        %376 = vmatpush2.msra.mxu0 0.0
        %377 = vmatprep.mubr.f32.mxu0 0.0
        %378 = vmatmul.mubr.f32.gmra.mxu0 %v311
        %v379 = vpop.f32.mrf.mxu0
        %v380 = vadd.f32 %v308, %v379
        %v381 = vpop.f32.mrf.mxu0
        %382 = vdwg.mxu0
        %384 = vrot.lane.b32.xlu0 %v380, 120
        %v385 = vpop.permute.xlu0 %384
        %386 = vrot.lane.b32.xlu0 %v380, 112
        %v387 = vpop.permute.xlu0 %386
        %388 = vrot.lane.b32.xlu0 %v380, 104
        %v389 = vpop.permute.xlu0 %388
        %v390 = vld [vmem:[%s283] sm:$0xff]
        %vm391 = vcmp.gt.s32.totalorder %v390, 0
        %v392 = vsel %vm391, -1e+09, 0.0
        %393 = vrot.lane.b32.xlu0 %v380, 96
        %v394 = vpop.permute.xlu0 %393
        %vm395 = vcmask 64512
        %v396 = vsel %vm395, %v380, 0
        %v398 = vsel %vm395, %v394, 0
        %400 = vmatprep.subr.mxu0 0.0
        %401 = vmatpush1.xpose.msra.mxu0 0.0
        %402 = vmatprep.subr.mxu0 0.0
        %403 = vmatpush1.xpose.msra.mxu0 0.0
        %404 = vmatprep.subr.mxu0 0.0
        %405 = vmatpush1.xpose.msra.mxu0 0.0
        %406 = vmatprep.subr.mxu0 0.0
        %407 = vmatpush1.xpose.msra.mxu0 0.0
        %408 = vmatprep.subr.mxu0 0.0
        %409 = vmatpush1.xpose.msra.mxu0 0.0
        %410 = vmatprep.subr.mxu0 0.0
        %411 = vmatpush1.xpose.msra.mxu0 0.0
        %412 = vmatprep.subr.mxu0 0.0
        %413 = vmatpush1.xpose.msra.mxu0 0.0
        %414 = vmatprep.subr.mxu0 0.0
        %415 = vmatpush1.xpose.msra.mxu0 0.0
        %416 = vmatprep.subr.mxu0 0.0
        %417 = vmatpush1.xpose.msra.mxu0 0.0
        %418 = vmatprep.subr.mxu0 0.0
        %419 = vmatpush1.xpose.msra.mxu0 0.0
        %420 = vmatprep.subr.mxu0 0.0
        %421 = vmatpush1.xpose.msra.mxu0 0.0
        %422 = vmatprep.subr.mxu0 0.0
        %423 = vmatpush1.xpose.msra.mxu0 0.0
        %424 = vmatprep.subr.mxu0 0.0
        %425 = vmatpush1.xpose.msra.mxu0 0.0
        %426 = vmatprep.subr.mxu0 0.0
        %427 = vmatpush1.xpose.msra.mxu0 0.0
        %428 = vmatprep.subr.mxu0 0.0
        %429 = vmatpush1.xpose.msra.mxu0 0.0
        %430 = vmatprep.subr.mxu0 0.0
        %431 = vmatpush1.xpose.msra.mxu0 %v398
        %432 = vmatprep.subr.mxu0 0.0
        %433 = vmatpush2.xpose.msra.mxu0 0.0
        %434 = vmatprep.subr.mxu0 0.0
        %435 = vmatpush2.xpose.msra.mxu0 0.0
        %436 = vmatprep.subr.mxu0 0.0
        %437 = vmatpush2.xpose.msra.mxu0 0.0
        %438 = vmatprep.subr.mxu0 0.0
        %439 = vmatpush2.xpose.msra.mxu0 0.0
        %440 = vmatprep.subr.mxu0 0.0
        %441 = vmatpush2.xpose.msra.mxu0 0.0
        %442 = vmatprep.subr.mxu0 0.0
        %443 = vmatpush2.xpose.msra.mxu0 0.0
        %444 = vmatprep.subr.mxu0 0.0
        %445 = vmatpush2.xpose.msra.mxu0 0.0
        %446 = vmatprep.subr.mxu0 0.0
        %447 = vmatpush2.xpose.msra.mxu0 0.0
        %448 = vmatprep.subr.mxu0 0.0
        %449 = vmatpush2.xpose.msra.mxu0 0.0
        %450 = vmatprep.subr.mxu0 0.0
        %451 = vmatpush2.xpose.msra.mxu0 0.0
        %452 = vmatprep.subr.mxu0 0.0
        %453 = vmatpush2.xpose.msra.mxu0 0.0
        %454 = vmatprep.subr.mxu0 0.0
        %455 = vmatpush2.xpose.msra.mxu0 0.0
        %456 = vmatprep.subr.mxu0 0.0
        %457 = vmatpush2.xpose.msra.mxu0 0.0
        %458 = vmatprep.subr.mxu0 0.0
        %459 = vmatpush2.xpose.msra.mxu0 0.0
        %460 = vmatprep.subr.mxu0 0.0
        %461 = vmatpush2.xpose.msra.mxu0 0.0
        %462 = vmatprep.subr.mxu0 0.0
        %463 = vmatpush2.xpose.msra.mxu0 0.0
        %464 = vmatprep.mubr.f32.mxu0 0.0
        %465 = vmatmul.mubr.f32.gmra.mxu0 %v396
        %v466 = vpop.f32.mrf.mxu0
        %v467 = vadd.f32 %v392, %v466
        %v468 = vpop.f32.mrf.mxu0
        %469 = vdwg.mxu0
        %470 = vrot.lane.b32.xlu0 %v385, 96
        %v471 = vpop.permute.xlu0 %470
        %v472 = vsel %vm395, %v385, 0
        %v474 = vsel %vm395, %v471, 0
        %476 = vmatprep.subr.mxu0 0.0
        %477 = vmatpush1.xpose.msra.mxu0 0.0
        %478 = vmatprep.subr.mxu0 0.0
        %479 = vmatpush1.xpose.msra.mxu0 0.0
        %480 = vmatprep.subr.mxu0 0.0
        %481 = vmatpush1.xpose.msra.mxu0 0.0
        %482 = vmatprep.subr.mxu0 0.0
        %483 = vmatpush1.xpose.msra.mxu0 0.0
        %484 = vmatprep.subr.mxu0 0.0
        %485 = vmatpush1.xpose.msra.mxu0 0.0
        %486 = vmatprep.subr.mxu0 0.0
        %487 = vmatpush1.xpose.msra.mxu0 0.0
        %488 = vmatprep.subr.mxu0 0.0
        %489 = vmatpush1.xpose.msra.mxu0 0.0
        %490 = vmatprep.subr.mxu0 0.0
        %491 = vmatpush1.xpose.msra.mxu0 0.0
        %492 = vmatprep.subr.mxu0 0.0
        %493 = vmatpush1.xpose.msra.mxu0 0.0
        %494 = vmatprep.subr.mxu0 0.0
        %495 = vmatpush1.xpose.msra.mxu0 0.0
        %496 = vmatprep.subr.mxu0 0.0
        %497 = vmatpush1.xpose.msra.mxu0 0.0
        %498 = vmatprep.subr.mxu0 0.0
        %499 = vmatpush1.xpose.msra.mxu0 0.0
        %500 = vmatprep.subr.mxu0 0.0
        %501 = vmatpush1.xpose.msra.mxu0 0.0
        %502 = vmatprep.subr.mxu0 0.0
        %503 = vmatpush1.xpose.msra.mxu0 0.0
        %504 = vmatprep.subr.mxu0 0.0
        %505 = vmatpush1.xpose.msra.mxu0 0.0
        %506 = vmatprep.subr.mxu0 0.0
        %507 = vmatpush1.xpose.msra.mxu0 %v474
        %508 = vmatprep.subr.mxu0 0.0
        %509 = vmatpush2.xpose.msra.mxu0 0.0
        %510 = vmatprep.subr.mxu0 0.0
        %511 = vmatpush2.xpose.msra.mxu0 0.0
        %512 = vmatprep.subr.mxu0 0.0
        %513 = vmatpush2.xpose.msra.mxu0 0.0
        %514 = vmatprep.subr.mxu0 0.0
        %515 = vmatpush2.xpose.msra.mxu0 0.0
        %516 = vmatprep.subr.mxu0 0.0
        %517 = vmatpush2.xpose.msra.mxu0 0.0
        %518 = vmatprep.subr.mxu0 0.0
        %519 = vmatpush2.xpose.msra.mxu0 0.0
        %520 = vmatprep.subr.mxu0 0.0
        %521 = vmatpush2.xpose.msra.mxu0 0.0
        %522 = vmatprep.subr.mxu0 0.0
        %523 = vmatpush2.xpose.msra.mxu0 0.0
        %524 = vmatprep.subr.mxu0 0.0
        %525 = vmatpush2.xpose.msra.mxu0 0.0
        %526 = vmatprep.subr.mxu0 0.0
        %527 = vmatpush2.xpose.msra.mxu0 0.0
        %528 = vmatprep.subr.mxu0 0.0
        %529 = vmatpush2.xpose.msra.mxu0 0.0
        %530 = vmatprep.subr.mxu0 0.0
        %531 = vmatpush2.xpose.msra.mxu0 0.0
        %532 = vmatprep.subr.mxu0 0.0
        %533 = vmatpush2.xpose.msra.mxu0 0.0
        %534 = vmatprep.subr.mxu0 0.0
        %535 = vmatpush2.xpose.msra.mxu0 0.0
        %536 = vmatprep.subr.mxu0 0.0
        %537 = vmatpush2.xpose.msra.mxu0 0.0
        %538 = vmatprep.subr.mxu0 0.0
        %539 = vmatpush2.xpose.msra.mxu0 0.0
        %540 = vmatprep.mubr.f32.mxu0 0.0
        %541 = vmatmul.mubr.f32.gmra.mxu0 %v472
        %v542 = vpop.f32.mrf.mxu0
        %v543 = vadd.f32 %v392, %v542
        %v544 = vpop.f32.mrf.mxu0
        %545 = vdwg.mxu0
        %546 = vrot.lane.b32.xlu0 %v387, 96
        %v547 = vpop.permute.xlu0 %546
        %v548 = vsel %vm395, %v387, 0
        %v550 = vsel %vm395, %v547, 0
        %552 = vmatprep.subr.mxu0 0.0
        %553 = vmatpush1.xpose.msra.mxu0 0.0
        %554 = vmatprep.subr.mxu0 0.0
        %555 = vmatpush1.xpose.msra.mxu0 0.0
        %556 = vmatprep.subr.mxu0 0.0
        %557 = vmatpush1.xpose.msra.mxu0 0.0
        %558 = vmatprep.subr.mxu0 0.0
        %559 = vmatpush1.xpose.msra.mxu0 0.0
        %560 = vmatprep.subr.mxu0 0.0
        %561 = vmatpush1.xpose.msra.mxu0 0.0
        %562 = vmatprep.subr.mxu0 0.0
        %563 = vmatpush1.xpose.msra.mxu0 0.0
        %564 = vmatprep.subr.mxu0 0.0
        %565 = vmatpush1.xpose.msra.mxu0 0.0
        %566 = vmatprep.subr.mxu0 0.0
        %567 = vmatpush1.xpose.msra.mxu0 0.0
        %568 = vmatprep.subr.mxu0 0.0
        %569 = vmatpush1.xpose.msra.mxu0 0.0
        %570 = vmatprep.subr.mxu0 0.0
        %571 = vmatpush1.xpose.msra.mxu0 0.0
        %572 = vmatprep.subr.mxu0 0.0
        %573 = vmatpush1.xpose.msra.mxu0 0.0
        %574 = vmatprep.subr.mxu0 0.0
        %575 = vmatpush1.xpose.msra.mxu0 0.0
        %576 = vmatprep.subr.mxu0 0.0
        %577 = vmatpush1.xpose.msra.mxu0 0.0
        %578 = vmatprep.subr.mxu0 0.0
        %579 = vmatpush1.xpose.msra.mxu0 0.0
        %580 = vmatprep.subr.mxu0 0.0
        %581 = vmatpush1.xpose.msra.mxu0 0.0
        %582 = vmatprep.subr.mxu0 0.0
        %583 = vmatpush1.xpose.msra.mxu0 %v550
        %584 = vmatprep.subr.mxu0 0.0
        %585 = vmatpush2.xpose.msra.mxu0 0.0
        %586 = vmatprep.subr.mxu0 0.0
        %587 = vmatpush2.xpose.msra.mxu0 0.0
        %588 = vmatprep.subr.mxu0 0.0
        %589 = vmatpush2.xpose.msra.mxu0 0.0
        %590 = vmatprep.subr.mxu0 0.0
        %591 = vmatpush2.xpose.msra.mxu0 0.0
        %592 = vmatprep.subr.mxu0 0.0
        %593 = vmatpush2.xpose.msra.mxu0 0.0
        %594 = vmatprep.subr.mxu0 0.0
        %595 = vmatpush2.xpose.msra.mxu0 0.0
        %596 = vmatprep.subr.mxu0 0.0
        %597 = vmatpush2.xpose.msra.mxu0 0.0
        %598 = vmatprep.subr.mxu0 0.0
        %599 = vmatpush2.xpose.msra.mxu0 0.0
        %600 = vmatprep.subr.mxu0 0.0
        %601 = vmatpush2.xpose.msra.mxu0 0.0
        %602 = vmatprep.subr.mxu0 0.0
        %603 = vmatpush2.xpose.msra.mxu0 0.0
        %604 = vmatprep.subr.mxu0 0.0
        %605 = vmatpush2.xpose.msra.mxu0 0.0
        %606 = vmatprep.subr.mxu0 0.0
        %607 = vmatpush2.xpose.msra.mxu0 0.0
        %608 = vmatprep.subr.mxu0 0.0
        %609 = vmatpush2.xpose.msra.mxu0 0.0
        %610 = vmatprep.subr.mxu0 0.0
        %611 = vmatpush2.xpose.msra.mxu0 0.0
        %612 = vmatprep.subr.mxu0 0.0
        %613 = vmatpush2.xpose.msra.mxu0 0.0
        %614 = vmatprep.subr.mxu0 0.0
        %615 = vmatpush2.xpose.msra.mxu0 0.0
        %616 = vmatprep.mubr.f32.mxu0 0.0
        %617 = vmatmul.mubr.f32.gmra.mxu0 %v548
        %v618 = vpop.f32.mrf.mxu0
        %v619 = vadd.f32 %v392, %v618
        %v620 = vpop.f32.mrf.mxu0
        %621 = vdwg.mxu0
        %622 = vrot.lane.b32.xlu0 %v389, 96
        %v623 = vpop.permute.xlu0 %622
        %v624 = vsel %vm395, %v389, 0
        %v626 = vsel %vm395, %v623, 0
        %628 = vmatprep.subr.mxu0 0.0
        %629 = vmatpush1.xpose.msra.mxu0 0.0
        %630 = vmatprep.subr.mxu0 0.0
        %631 = vmatpush1.xpose.msra.mxu0 0.0
        %632 = vmatprep.subr.mxu0 0.0
        %633 = vmatpush1.xpose.msra.mxu0 0.0
        %634 = vmatprep.subr.mxu0 0.0
        %635 = vmatpush1.xpose.msra.mxu0 0.0
        %636 = vmatprep.subr.mxu0 0.0
        %637 = vmatpush1.xpose.msra.mxu0 0.0
        %638 = vmatprep.subr.mxu0 0.0
        %639 = vmatpush1.xpose.msra.mxu0 0.0
        %640 = vmatprep.subr.mxu0 0.0
        %641 = vmatpush1.xpose.msra.mxu0 0.0
        %642 = vmatprep.subr.mxu0 0.0
        %643 = vmatpush1.xpose.msra.mxu0 0.0
        %644 = vmatprep.subr.mxu0 0.0
        %645 = vmatpush1.xpose.msra.mxu0 0.0
        %646 = vmatprep.subr.mxu0 0.0
        %647 = vmatpush1.xpose.msra.mxu0 0.0
        %648 = vmatprep.subr.mxu0 0.0
        %649 = vmatpush1.xpose.msra.mxu0 0.0
        %650 = vmatprep.subr.mxu0 0.0
        %651 = vmatpush1.xpose.msra.mxu0 0.0
        %652 = vmatprep.subr.mxu0 0.0
        %653 = vmatpush1.xpose.msra.mxu0 0.0
        %654 = vmatprep.subr.mxu0 0.0
        %655 = vmatpush1.xpose.msra.mxu0 0.0
        %656 = vmatprep.subr.mxu0 0.0
        %657 = vmatpush1.xpose.msra.mxu0 0.0
        %658 = vmatprep.subr.mxu0 0.0
        %659 = vmatpush1.xpose.msra.mxu0 %v626
        %660 = vmatprep.subr.mxu0 0.0
        %661 = vmatpush2.xpose.msra.mxu0 0.0
        %662 = vmatprep.subr.mxu0 0.0
        %663 = vmatpush2.xpose.msra.mxu0 0.0
        %664 = vmatprep.subr.mxu0 0.0
        %665 = vmatpush2.xpose.msra.mxu0 0.0
        %666 = vmatprep.subr.mxu0 0.0
        %667 = vmatpush2.xpose.msra.mxu0 0.0
        %668 = vmatprep.subr.mxu0 0.0
        %669 = vmatpush2.xpose.msra.mxu0 0.0
        %670 = vmatprep.subr.mxu0 0.0
        %671 = vmatpush2.xpose.msra.mxu0 0.0
        %672 = vmatprep.subr.mxu0 0.0
        %673 = vmatpush2.xpose.msra.mxu0 0.0
        %674 = vmatprep.subr.mxu0 0.0
        %675 = vmatpush2.xpose.msra.mxu0 0.0
        %676 = vmatprep.subr.mxu0 0.0
        %677 = vmatpush2.xpose.msra.mxu0 0.0
        %678 = vmatprep.subr.mxu0 0.0
        %679 = vmatpush2.xpose.msra.mxu0 0.0
        %680 = vmatprep.subr.mxu0 0.0
        %681 = vmatpush2.xpose.msra.mxu0 0.0
        %682 = vmatprep.subr.mxu0 0.0
        %683 = vmatpush2.xpose.msra.mxu0 0.0
        %684 = vmatprep.subr.mxu0 0.0
        %685 = vmatpush2.xpose.msra.mxu0 0.0
        %686 = vmatprep.subr.mxu0 0.0
        %687 = vmatpush2.xpose.msra.mxu0 0.0
        %688 = vmatprep.subr.mxu0 0.0
        %689 = vmatpush2.xpose.msra.mxu0 0.0
        %690 = vmatprep.subr.mxu0 0.0
        %691 = vmatpush2.xpose.msra.mxu0 0.0
        %692 = vmatprep.mubr.f32.mxu0 0.0
        %693 = vmatmul.mubr.f32.gmra.mxu0 %v624
        %v694 = vpop.f32.mrf.mxu0
        %v695 = vadd.f32 %v392, %v694
        %v696 = vpop.f32.mrf.mxu0
        %697 = vdwg.mxu0
        %v698 = vsel %vm395, %v467, -inf
        %699 = vmax.xlane.f32.xlu0 %v698
        %v700 = vpop.xlane.xlu0 %699
        %v701 = vsel %vm395, %v543, -inf
        %702 = vmax.xlane.f32.xlu0 %v701
        %v703 = vpop.xlane.xlu0 %702
        %v704 = vsel %vm395, %v619, -inf
        %705 = vmax.xlane.f32.xlu0 %v704
        %v706 = vpop.xlane.xlu0 %705
        %v707 = vsel %vm395, %v695, -inf
        %708 = vmax.xlane.f32.xlu0 %v707
        %v709 = vpop.xlane.xlu0 %708
        %v710 = vsub.f32 %v467, %v700
        %v711 = vsub.f32 %v543, %v703
        %v712 = vsub.f32 %v619, %v706
        %v713 = vsub.f32 %v695, %v709
        %v714 = vmul.f32 %v710, 1.442695
        %v715 = vpow.pop %v714
        %v716 = vmul.f32 %v711, 1.442695
        %v717 = vpow.pop %v716
        %v718 = vmul.f32 %v712, 1.442695
        %v719 = vpow.pop %v718
        %v720 = vmul.f32 %v713, 1.442695
        %v721 = vpow.pop %v720
        %v722 = vsel %vm395, %v715, 0.0
        %723 = vadd.xlane.f32.xlu0 %v722
        %v724 = vpop.xlane.xlu0 %723
        %v725 = vsel %vm395, %v717, 0.0
        %726 = vadd.xlane.f32.xlu0 %v725
        %v727 = vpop.xlane.xlu0 %726
        %v728 = vsel %vm395, %v719, 0.0
        %729 = vadd.xlane.f32.xlu0 %v728
        %v730 = vpop.xlane.xlu0 %729
        %v731 = vsel %vm395, %v721, 0.0
        %732 = vadd.xlane.f32.xlu0 %v731
        %v733 = vpop.xlane.xlu0 %732
        %v734 = vrcp.pop %v724
        %v735 = vmul.f32 %v715, %v734
        %v736 = vrcp.pop %v727
        %v737 = vmul.f32 %v717, %v736
        %v738 = vrcp.pop %v730
        %v739 = vmul.f32 %v719, %v738
        %v740 = vrcp.pop %v733
        %v741 = vmul.f32 %v721, %v740
        %742 = vst.msk [vmem:[%s279] sm:$0xff] %vm395, %v735
        %743 = vst.msk [vmem:[%s279 + $0x8] sm:$0xff] %vm395, %v737
        %744 = vst.msk [vmem:[%s279 + $0x10] sm:$0xff] %vm395, %v739
        %745 = vst.msk [vmem:[%s279 + $0x18] sm:$0xff] %vm395, %v741
        %746 = vrot.lane.b32.xlu0 %v380, 64
        %v747 = vpop.permute.xlu0 %746
        %v750 = vsel %vm395, %v735, 0
        %752 = vmatprep.subr.mxu0 0.0
        %753 = vmatpush1.msra.mxu0 0.0
        %754 = vmatprep.subr.mxu0 0.0
        %755 = vmatpush1.msra.mxu0 0.0
        %756 = vmatprep.subr.mxu0 0.0
        %757 = vmatpush1.msra.mxu0 0.0
        %758 = vmatprep.subr.mxu0 0.0
        %759 = vmatpush1.msra.mxu0 0.0
        %760 = vmatprep.subr.mxu0 0.0
        %761 = vmatpush1.msra.mxu0 0.0
        %762 = vmatprep.subr.mxu0 0.0
        %763 = vmatpush1.msra.mxu0 0.0
        %764 = vmatprep.subr.mxu0 0.0
        %765 = vmatpush1.msra.mxu0 0.0
        %766 = vmatprep.subr.mxu0 0.0
        %767 = vmatpush1.msra.mxu0 0.0
        %768 = vmatprep.subr.mxu0 0.0
        %769 = vmatpush1.msra.mxu0 0.0
        %770 = vmatprep.subr.mxu0 0.0
        %771 = vmatpush1.msra.mxu0 0.0
        %772 = vmatprep.subr.mxu0 0.0
        %773 = vmatpush1.msra.mxu0 0.0
        %774 = vmatprep.subr.mxu0 0.0
        %775 = vmatpush1.msra.mxu0 0.0
        %776 = vmatprep.subr.mxu0 0.0
        %777 = vmatpush1.msra.mxu0 0.0
        %778 = vmatprep.subr.mxu0 0.0
        %779 = vmatpush1.msra.mxu0 0.0
        %780 = vmatprep.subr.mxu0 0.0
        %781 = vmatpush1.msra.mxu0 0.0
        %782 = vmatprep.subr.mxu0 0.0
        %783 = vmatpush1.msra.mxu0 %v747
        %784 = vmatprep.subr.mxu0 0.0
        %785 = vmatpush2.msra.mxu0 0.0
        %786 = vmatprep.subr.mxu0 0.0
        %787 = vmatpush2.msra.mxu0 0.0
        %788 = vmatprep.subr.mxu0 0.0
        %789 = vmatpush2.msra.mxu0 0.0
        %790 = vmatprep.subr.mxu0 0.0
        %791 = vmatpush2.msra.mxu0 0.0
        %792 = vmatprep.subr.mxu0 0.0
        %793 = vmatpush2.msra.mxu0 0.0
        %794 = vmatprep.subr.mxu0 0.0
        %795 = vmatpush2.msra.mxu0 0.0
        %796 = vmatprep.subr.mxu0 0.0
        %797 = vmatpush2.msra.mxu0 0.0
        %798 = vmatprep.subr.mxu0 0.0
        %799 = vmatpush2.msra.mxu0 0.0
        %800 = vmatprep.subr.mxu0 0.0
        %801 = vmatpush2.msra.mxu0 0.0
        %802 = vmatprep.subr.mxu0 0.0
        %803 = vmatpush2.msra.mxu0 0.0
        %804 = vmatprep.subr.mxu0 0.0
        %805 = vmatpush2.msra.mxu0 0.0
        %806 = vmatprep.subr.mxu0 0.0
        %807 = vmatpush2.msra.mxu0 0.0
        %808 = vmatprep.subr.mxu0 0.0
        %809 = vmatpush2.msra.mxu0 0.0
        %810 = vmatprep.subr.mxu0 0.0
        %811 = vmatpush2.msra.mxu0 0.0
        %812 = vmatprep.subr.mxu0 0.0
        %813 = vmatpush2.msra.mxu0 0.0
        %814 = vmatprep.subr.mxu0 0.0
        %815 = vmatpush2.msra.mxu0 0.0
        %816 = vmatprep.mubr.f32.mxu0 0.0
        %817 = vmatmul.mubr.f32.gmra.mxu0 %v750
        %v818 = vpop.f32.mrf.mxu0
        %v819 = vadd.f32 0.0, %v818
        %v820 = vpop.f32.mrf.mxu0
        %821 = vdwg.mxu0
        %822 = vrot.lane.b32.xlu0 %v385, 64
        %v823 = vpop.permute.xlu0 %822
        %v826 = vsel %vm395, %v737, 0
        %828 = vmatprep.subr.mxu0 0.0
        %829 = vmatpush1.msra.mxu0 0.0
        %830 = vmatprep.subr.mxu0 0.0
        %831 = vmatpush1.msra.mxu0 0.0
        %832 = vmatprep.subr.mxu0 0.0
        %833 = vmatpush1.msra.mxu0 0.0
        %834 = vmatprep.subr.mxu0 0.0
        %835 = vmatpush1.msra.mxu0 0.0
        %836 = vmatprep.subr.mxu0 0.0
        %837 = vmatpush1.msra.mxu0 0.0
        %838 = vmatprep.subr.mxu0 0.0
        %839 = vmatpush1.msra.mxu0 0.0
        %840 = vmatprep.subr.mxu0 0.0
        %841 = vmatpush1.msra.mxu0 0.0
        %842 = vmatprep.subr.mxu0 0.0
        %843 = vmatpush1.msra.mxu0 0.0
        %844 = vmatprep.subr.mxu0 0.0
        %845 = vmatpush1.msra.mxu0 0.0
        %846 = vmatprep.subr.mxu0 0.0
        %847 = vmatpush1.msra.mxu0 0.0
        %848 = vmatprep.subr.mxu0 0.0
        %849 = vmatpush1.msra.mxu0 0.0
        %850 = vmatprep.subr.mxu0 0.0
        %851 = vmatpush1.msra.mxu0 0.0
        %852 = vmatprep.subr.mxu0 0.0
        %853 = vmatpush1.msra.mxu0 0.0
        %854 = vmatprep.subr.mxu0 0.0
        %855 = vmatpush1.msra.mxu0 0.0
        %856 = vmatprep.subr.mxu0 0.0
        %857 = vmatpush1.msra.mxu0 0.0
        %858 = vmatprep.subr.mxu0 0.0
        %859 = vmatpush1.msra.mxu0 %v823
        %860 = vmatprep.subr.mxu0 0.0
        %861 = vmatpush2.msra.mxu0 0.0
        %862 = vmatprep.subr.mxu0 0.0
        %863 = vmatpush2.msra.mxu0 0.0
        %864 = vmatprep.subr.mxu0 0.0
        %865 = vmatpush2.msra.mxu0 0.0
        %866 = vmatprep.subr.mxu0 0.0
        %867 = vmatpush2.msra.mxu0 0.0
        %868 = vmatprep.subr.mxu0 0.0
        %869 = vmatpush2.msra.mxu0 0.0
        %870 = vmatprep.subr.mxu0 0.0
        %871 = vmatpush2.msra.mxu0 0.0
        %872 = vmatprep.subr.mxu0 0.0
        %873 = vmatpush2.msra.mxu0 0.0
        %874 = vmatprep.subr.mxu0 0.0
        %875 = vmatpush2.msra.mxu0 0.0
        %876 = vmatprep.subr.mxu0 0.0
        %877 = vmatpush2.msra.mxu0 0.0
        %878 = vmatprep.subr.mxu0 0.0
        %879 = vmatpush2.msra.mxu0 0.0
        %880 = vmatprep.subr.mxu0 0.0
        %881 = vmatpush2.msra.mxu0 0.0
        %882 = vmatprep.subr.mxu0 0.0
        %883 = vmatpush2.msra.mxu0 0.0
        %884 = vmatprep.subr.mxu0 0.0
        %885 = vmatpush2.msra.mxu0 0.0
        %886 = vmatprep.subr.mxu0 0.0
        %887 = vmatpush2.msra.mxu0 0.0
        %888 = vmatprep.subr.mxu0 0.0
        %889 = vmatpush2.msra.mxu0 0.0
        %890 = vmatprep.subr.mxu0 0.0
        %891 = vmatpush2.msra.mxu0 0.0
        %892 = vmatprep.mubr.f32.mxu0 0.0
        %893 = vmatmul.mubr.f32.gmra.mxu0 %v826
        %v894 = vpop.f32.mrf.mxu0
        %v895 = vadd.f32 0.0, %v894
        %v896 = vpop.f32.mrf.mxu0
        %897 = vdwg.mxu0
        %898 = vrot.lane.b32.xlu0 %v387, 64
        %v899 = vpop.permute.xlu0 %898
        %v902 = vsel %vm395, %v739, 0
        %904 = vmatprep.subr.mxu0 0.0
        %905 = vmatpush1.msra.mxu0 0.0
        %906 = vmatprep.subr.mxu0 0.0
        %907 = vmatpush1.msra.mxu0 0.0
        %908 = vmatprep.subr.mxu0 0.0
        %909 = vmatpush1.msra.mxu0 0.0
        %910 = vmatprep.subr.mxu0 0.0
        %911 = vmatpush1.msra.mxu0 0.0
        %912 = vmatprep.subr.mxu0 0.0
        %913 = vmatpush1.msra.mxu0 0.0
        %914 = vmatprep.subr.mxu0 0.0
        %915 = vmatpush1.msra.mxu0 0.0
        %916 = vmatprep.subr.mxu0 0.0
        %917 = vmatpush1.msra.mxu0 0.0
        %918 = vmatprep.subr.mxu0 0.0
        %919 = vmatpush1.msra.mxu0 0.0
        %920 = vmatprep.subr.mxu0 0.0
        %921 = vmatpush1.msra.mxu0 0.0
        %922 = vmatprep.subr.mxu0 0.0
        %923 = vmatpush1.msra.mxu0 0.0
        %924 = vmatprep.subr.mxu0 0.0
        %925 = vmatpush1.msra.mxu0 0.0
        %926 = vmatprep.subr.mxu0 0.0
        %927 = vmatpush1.msra.mxu0 0.0
        %928 = vmatprep.subr.mxu0 0.0
        %929 = vmatpush1.msra.mxu0 0.0
        %930 = vmatprep.subr.mxu0 0.0
        %931 = vmatpush1.msra.mxu0 0.0
        %932 = vmatprep.subr.mxu0 0.0
        %933 = vmatpush1.msra.mxu0 0.0
        %934 = vmatprep.subr.mxu0 0.0
        %935 = vmatpush1.msra.mxu0 %v899
        %936 = vmatprep.subr.mxu0 0.0
        %937 = vmatpush2.msra.mxu0 0.0
        %938 = vmatprep.subr.mxu0 0.0
        %939 = vmatpush2.msra.mxu0 0.0
        %940 = vmatprep.subr.mxu0 0.0
        %941 = vmatpush2.msra.mxu0 0.0
        %942 = vmatprep.subr.mxu0 0.0
        %943 = vmatpush2.msra.mxu0 0.0
        %944 = vmatprep.subr.mxu0 0.0
        %945 = vmatpush2.msra.mxu0 0.0
        %946 = vmatprep.subr.mxu0 0.0
        %947 = vmatpush2.msra.mxu0 0.0
        %948 = vmatprep.subr.mxu0 0.0
        %949 = vmatpush2.msra.mxu0 0.0
        %950 = vmatprep.subr.mxu0 0.0
        %951 = vmatpush2.msra.mxu0 0.0
        %952 = vmatprep.subr.mxu0 0.0
        %953 = vmatpush2.msra.mxu0 0.0
        %954 = vmatprep.subr.mxu0 0.0
        %955 = vmatpush2.msra.mxu0 0.0
        %956 = vmatprep.subr.mxu0 0.0
        %957 = vmatpush2.msra.mxu0 0.0
        %958 = vmatprep.subr.mxu0 0.0
        %959 = vmatpush2.msra.mxu0 0.0
        %960 = vmatprep.subr.mxu0 0.0
        %961 = vmatpush2.msra.mxu0 0.0
        %962 = vmatprep.subr.mxu0 0.0
        %963 = vmatpush2.msra.mxu0 0.0
        %964 = vmatprep.subr.mxu0 0.0
        %965 = vmatpush2.msra.mxu0 0.0
        %966 = vmatprep.subr.mxu0 0.0
        %967 = vmatpush2.msra.mxu0 0.0
        %968 = vmatprep.mubr.f32.mxu0 0.0
        %969 = vmatmul.mubr.f32.gmra.mxu0 %v902
        %v970 = vpop.f32.mrf.mxu0
        %v971 = vadd.f32 0.0, %v970
        %v972 = vpop.f32.mrf.mxu0
        %973 = vdwg.mxu0
        %974 = vrot.lane.b32.xlu0 %v389, 64
        %v975 = vpop.permute.xlu0 %974
        %v978 = vsel %vm395, %v741, 0
        %980 = vmatprep.subr.mxu0 0.0
        %981 = vmatpush1.msra.mxu0 0.0
        %982 = vmatprep.subr.mxu0 0.0
        %983 = vmatpush1.msra.mxu0 0.0
        %984 = vmatprep.subr.mxu0 0.0
        %985 = vmatpush1.msra.mxu0 0.0
        %986 = vmatprep.subr.mxu0 0.0
        %987 = vmatpush1.msra.mxu0 0.0
        %988 = vmatprep.subr.mxu0 0.0
        %989 = vmatpush1.msra.mxu0 0.0
        %990 = vmatprep.subr.mxu0 0.0
        %991 = vmatpush1.msra.mxu0 0.0
        %992 = vmatprep.subr.mxu0 0.0
        %993 = vmatpush1.msra.mxu0 0.0
        %994 = vmatprep.subr.mxu0 0.0
        %995 = vmatpush1.msra.mxu0 0.0
        %996 = vmatprep.subr.mxu0 0.0
        %997 = vmatpush1.msra.mxu0 0.0
        %998 = vmatprep.subr.mxu0 0.0
        %999 = vmatpush1.msra.mxu0 0.0
        %1000 = vmatprep.subr.mxu0 0.0
        %1001 = vmatpush1.msra.mxu0 0.0
        %1002 = vmatprep.subr.mxu0 0.0
        %1003 = vmatpush1.msra.mxu0 0.0
        %1004 = vmatprep.subr.mxu0 0.0
        %1005 = vmatpush1.msra.mxu0 0.0
        %1006 = vmatprep.subr.mxu0 0.0
        %1007 = vmatpush1.msra.mxu0 0.0
        %1008 = vmatprep.subr.mxu0 0.0
        %1009 = vmatpush1.msra.mxu0 0.0
        %1010 = vmatprep.subr.mxu0 0.0
        %1011 = vmatpush1.msra.mxu0 %v975
        %1012 = vmatprep.subr.mxu0 0.0
        %1013 = vmatpush2.msra.mxu0 0.0
        %1014 = vmatprep.subr.mxu0 0.0
        %1015 = vmatpush2.msra.mxu0 0.0
        %1016 = vmatprep.subr.mxu0 0.0
        %1017 = vmatpush2.msra.mxu0 0.0
        %1018 = vmatprep.subr.mxu0 0.0
        %1019 = vmatpush2.msra.mxu0 0.0
        %1020 = vmatprep.subr.mxu0 0.0
        %1021 = vmatpush2.msra.mxu0 0.0
        %1022 = vmatprep.subr.mxu0 0.0
        %1023 = vmatpush2.msra.mxu0 0.0
        %1024 = vmatprep.subr.mxu0 0.0
        %1025 = vmatpush2.msra.mxu0 0.0
        %1026 = vmatprep.subr.mxu0 0.0
        %1027 = vmatpush2.msra.mxu0 0.0
        %1028 = vmatprep.subr.mxu0 0.0
        %1029 = vmatpush2.msra.mxu0 0.0
        %1030 = vmatprep.subr.mxu0 0.0
        %1031 = vmatpush2.msra.mxu0 0.0
        %1032 = vmatprep.subr.mxu0 0.0
        %1033 = vmatpush2.msra.mxu0 0.0
        %1034 = vmatprep.subr.mxu0 0.0
        %1035 = vmatpush2.msra.mxu0 0.0
        %1036 = vmatprep.subr.mxu0 0.0
        %1037 = vmatpush2.msra.mxu0 0.0
        %1038 = vmatprep.subr.mxu0 0.0
        %1039 = vmatpush2.msra.mxu0 0.0
        %1040 = vmatprep.subr.mxu0 0.0
        %1041 = vmatpush2.msra.mxu0 0.0
        %1042 = vmatprep.subr.mxu0 0.0
        %1043 = vmatpush2.msra.mxu0 0.0
        %1044 = vmatprep.mubr.f32.mxu0 0.0
        %1045 = vmatmul.mubr.f32.gmra.mxu0 %v978
        %v1046 = vpop.f32.mrf.mxu0
        %v1047 = vadd.f32 0.0, %v1046
        %v1048 = vpop.f32.mrf.mxu0
        %1049 = vdwg.mxu0
        %1051 = vrot.lane.b32.xlu0 %v895, 8
        %v1052 = vpop.permute.xlu0 %1051
        %1055 = vrot.lane.b32.xlu0 %v971, 16
        %v1056 = vpop.permute.xlu0 %1055
        %1059 = vrot.lane.b32.xlu0 %v1047, 24
        %v1060 = vpop.permute.xlu0 %1059
        %v1062 = vsel %vm395, %v819, %v1052
        %vm1063 = vcmask 130048
        %v1064 = vsel %vm1063, %v1062, %v1056
        %vm1065 = vcmask 195584
        %v1066 = vsel %vm1065, %v1064, %v1060
        %v1067 = vlaneseq
        %v1068 = vshrl.u32 %v1067, 7
        %v1069 = vsub.s32 0, %v1068
        %v1070 = vrot.slane %v298, %v1069
        %1075 = vrot.lane.b32.xlu0 %v289, 32
        %v1076 = vpop.permute.xlu0 %1075
        %1077 = vrot.lane.b32.xlu0 %v291, 32
        %v1078 = vpop.permute.xlu0 %1077
        %1079 = vrot.lane.b32.xlu0 %v293, 32
        %v1080 = vpop.permute.xlu0 %1079
        %1081 = vrot.lane.b32.xlu0 %v295, 32
        %v1082 = vpop.permute.xlu0 %1081
        %v1088 = vsel %vm309, %v1066, 0
        %1090 = vmatprep.subr.mxu0 0.0
        %1091 = vmatpush1.msra.mxu0 0.0
        %1092 = vmatprep.subr.mxu0 0.0
        %1093 = vmatpush1.msra.mxu0 0.0
        %1094 = vmatprep.subr.mxu0 0.0
        %1095 = vmatpush1.msra.mxu0 0.0
        %1096 = vmatprep.subr.mxu0 0.0
        %1097 = vmatpush1.msra.mxu0 0.0
        %1098 = vmatprep.subr.mxu0 0.0
        %1099 = vmatpush1.msra.mxu0 0.0
        %1100 = vmatprep.subr.mxu0 0.0
        %1101 = vmatpush1.msra.mxu0 0.0
        %1102 = vmatprep.subr.mxu0 0.0
        %1103 = vmatpush1.msra.mxu0 0.0
        %1104 = vmatprep.subr.mxu0 0.0
        %1105 = vmatpush1.msra.mxu0 0.0
        %1106 = vmatprep.subr.mxu0 0.0
        %1107 = vmatpush1.msra.mxu0 0.0
        %1108 = vmatprep.subr.mxu0 0.0
        %1109 = vmatpush1.msra.mxu0 0.0
        %1110 = vmatprep.subr.mxu0 0.0
        %1111 = vmatpush1.msra.mxu0 0.0
        %1112 = vmatprep.subr.mxu0 0.0
        %1113 = vmatpush1.msra.mxu0 0.0
        %1114 = vmatprep.subr.mxu0 0.0
        %1115 = vmatpush1.msra.mxu0 %v1082
        %1116 = vmatprep.subr.mxu0 0.0
        %1117 = vmatpush1.msra.mxu0 %v1080
        %1118 = vmatprep.subr.mxu0 0.0
        %1119 = vmatpush1.msra.mxu0 %v1078
        %1120 = vmatprep.subr.mxu0 0.0
        %1121 = vmatpush1.msra.mxu0 %v1076
        %1122 = vmatprep.subr.mxu0 0.0
        %1123 = vmatpush2.msra.mxu0 0.0
        %1124 = vmatprep.subr.mxu0 0.0
        %1125 = vmatpush2.msra.mxu0 0.0
        %1126 = vmatprep.subr.mxu0 0.0
        %1127 = vmatpush2.msra.mxu0 0.0
        %1128 = vmatprep.subr.mxu0 0.0
        %1129 = vmatpush2.msra.mxu0 0.0
        %1130 = vmatprep.subr.mxu0 0.0
        %1131 = vmatpush2.msra.mxu0 0.0
        %1132 = vmatprep.subr.mxu0 0.0
        %1133 = vmatpush2.msra.mxu0 0.0
        %1134 = vmatprep.subr.mxu0 0.0
        %1135 = vmatpush2.msra.mxu0 0.0
        %1136 = vmatprep.subr.mxu0 0.0
        %1137 = vmatpush2.msra.mxu0 0.0
        %1138 = vmatprep.subr.mxu0 0.0
        %1139 = vmatpush2.msra.mxu0 0.0
        %1140 = vmatprep.subr.mxu0 0.0
        %1141 = vmatpush2.msra.mxu0 0.0
        %1142 = vmatprep.subr.mxu0 0.0
        %1143 = vmatpush2.msra.mxu0 0.0
        %1144 = vmatprep.subr.mxu0 0.0
        %1145 = vmatpush2.msra.mxu0 0.0
        %1146 = vmatprep.subr.mxu0 0.0
        %1147 = vmatpush2.msra.mxu0 0.0
        %1148 = vmatprep.subr.mxu0 0.0
        %1149 = vmatpush2.msra.mxu0 0.0
        %1150 = vmatprep.subr.mxu0 0.0
        %1151 = vmatpush2.msra.mxu0 0.0
        %1152 = vmatprep.subr.mxu0 0.0
        %1153 = vmatpush2.msra.mxu0 0.0
        %1154 = vmatprep.mubr.f32.mxu0 0.0
        %1155 = vmatmul.mubr.f32.gmra.mxu0 %v1088
        %v1156 = vpop.f32.mrf.mxu0
        %v1157 = vadd.f32 %v1070, %v1156
        %v1158 = vpop.f32.mrf.mxu0
        %1159 = vdwg.mxu0
        %v1160 = vadd.f32 %v1157, %v288
        %v1161 = vsel %vm309, %v1160, 0.0
        %1162 = vadd.xlane.f32.xlu0 %v1161
        %v1163 = vpop.xlane.xlu0 %1162
        %v1164 = vrcp.pop 32.0
        %v1165 = vmul.f32 %v1163, %v1164
        %v1166 = vsub.f32 %v1160, %v1165
        %v1167 = vmul.f32 %v1166, %v1166
        %v1168 = vsel %vm309, %v1167, 0.0
        %1169 = vadd.xlane.f32.xlu0 %v1168
        %v1170 = vpop.xlane.xlu0 %1169
        %v1171 = vmul.f32 %v1170, %v1164
        %v1172 = vadd.f32 %v1171, 1e-05
        %v1173 = vrsqrt.pop %v1172
        %v1174 = vmul.f32 %v1166, %v1173
        %v1175 = vlaneseq
        %v1176 = vshrl.u32 %v1175, 7
        %v1177 = vsub.s32 0, %v1176
        %v1178 = vrot.slane %v299, %v1177
        %v1179 = vmul.f32 %v1174, %v1178
        %v1180 = vlaneseq
        %v1181 = vshrl.u32 %v1180, 7
        %v1182 = vsub.s32 0, %v1181
        %v1183 = vrot.slane %v300, %v1182
        %v1184 = vadd.f32 %v1179, %v1183
        %v1185 = vlaneseq
        %v1186 = vshrl.u32 %v1185, 7
        %v1187 = vsub.s32 0, %v1186
        %v1188 = vrot.slane %v301, %v1187
        %v1190 = vsel %vm309, %v1184, 0
        %1192 = vmatprep.subr.mxu0 0.0
        %1193 = vmatpush1.msra.mxu0 0.0
        %1194 = vmatprep.subr.mxu0 0.0
        %1195 = vmatpush1.msra.mxu0 0.0
        %1196 = vmatprep.subr.mxu0 0.0
        %1197 = vmatpush1.msra.mxu0 0.0
        %1198 = vmatprep.subr.mxu0 0.0
        %1199 = vmatpush1.msra.mxu0 0.0
        %1200 = vmatprep.subr.mxu0 0.0
        %1201 = vmatpush1.msra.mxu0 0.0
        %1202 = vmatprep.subr.mxu0 0.0
        %1203 = vmatpush1.msra.mxu0 0.0
        %1204 = vmatprep.subr.mxu0 0.0
        %1205 = vmatpush1.msra.mxu0 0.0
        %1206 = vmatprep.subr.mxu0 0.0
        %1207 = vmatpush1.msra.mxu0 0.0
        %1208 = vmatprep.subr.mxu0 0.0
        %1209 = vmatpush1.msra.mxu0 0.0
        %1210 = vmatprep.subr.mxu0 0.0
        %1211 = vmatpush1.msra.mxu0 0.0
        %1212 = vmatprep.subr.mxu0 0.0
        %1213 = vmatpush1.msra.mxu0 0.0
        %1214 = vmatprep.subr.mxu0 0.0
        %1215 = vmatpush1.msra.mxu0 0.0
        %1216 = vmatprep.subr.mxu0 0.0
        %1217 = vmatpush1.msra.mxu0 %v296
        %1218 = vmatprep.subr.mxu0 0.0
        %1219 = vmatpush1.msra.mxu0 %v294
        %1220 = vmatprep.subr.mxu0 0.0
        %1221 = vmatpush1.msra.mxu0 %v292
        %1222 = vmatprep.subr.mxu0 0.0
        %1223 = vmatpush1.msra.mxu0 %v290
        %1224 = vmatprep.subr.mxu0 0.0
        %1225 = vmatpush2.msra.mxu0 0.0
        %1226 = vmatprep.subr.mxu0 0.0
        %1227 = vmatpush2.msra.mxu0 0.0
        %1228 = vmatprep.subr.mxu0 0.0
        %1229 = vmatpush2.msra.mxu0 0.0
        %1230 = vmatprep.subr.mxu0 0.0
        %1231 = vmatpush2.msra.mxu0 0.0
        %1232 = vmatprep.subr.mxu0 0.0
        %1233 = vmatpush2.msra.mxu0 0.0
        %1234 = vmatprep.subr.mxu0 0.0
        %1235 = vmatpush2.msra.mxu0 0.0
        %1236 = vmatprep.subr.mxu0 0.0
        %1237 = vmatpush2.msra.mxu0 0.0
        %1238 = vmatprep.subr.mxu0 0.0
        %1239 = vmatpush2.msra.mxu0 0.0
        %1240 = vmatprep.subr.mxu0 0.0
        %1241 = vmatpush2.msra.mxu0 0.0
        %1242 = vmatprep.subr.mxu0 0.0
        %1243 = vmatpush2.msra.mxu0 0.0
        %1244 = vmatprep.subr.mxu0 0.0
        %1245 = vmatpush2.msra.mxu0 0.0
        %1246 = vmatprep.subr.mxu0 0.0
        %1247 = vmatpush2.msra.mxu0 0.0
        %1248 = vmatprep.subr.mxu0 0.0
        %1249 = vmatpush2.msra.mxu0 0.0
        %1250 = vmatprep.subr.mxu0 0.0
        %1251 = vmatpush2.msra.mxu0 0.0
        %1252 = vmatprep.subr.mxu0 0.0
        %1253 = vmatpush2.msra.mxu0 0.0
        %1254 = vmatprep.subr.mxu0 0.0
        %1255 = vmatpush2.msra.mxu0 0.0
        %1256 = vmatprep.mubr.f32.mxu0 0.0
        %1257 = vmatmul.mubr.f32.gmra.mxu0 %v1190
        %v1258 = vpop.f32.mrf.mxu0
        %v1259 = vadd.f32 %v1188, %v1258
        %v1260 = vpop.f32.mrf.mxu0
        %1261 = vdwg.mxu0
        %v1262 = vmax.f32 %v1259, 0.0
        %v1263 = vld [vmem:[%s3] sm:$0xff]
        %v1264 = vld [vmem:[%s3 + $0x8] sm:$0xff]
        %v1265 = vld [vmem:[%s3 + $0x10] sm:$0xff]
        %v1266 = vld [vmem:[%s3 + $0x18] sm:$0xff]
        %v1267 = vld [vmem:[%s3 + $0x20] sm:$0xff]
        %v1268 = vld [vmem:[%s3 + $0x28] sm:$0xff]
        %v1269 = vld [vmem:[%s3 + $0x30] sm:$0xff]
        %v1270 = vld [vmem:[%s3 + $0x38] sm:$0xff]
        %v1271 = vlaneseq
        %v1272 = vshrl.u32 %v1271, 7
        %v1273 = vsub.s32 0, %v1272
        %v1274 = vrot.slane %v302, %v1273
        %vm1275 = vcmask 523264
        %v1277 = vsel %vm1275, %v1262, 0
        %1279 = vmatprep.subr.mxu0 0.0
        %1280 = vmatpush1.msra.mxu0 0.0
        %1281 = vmatprep.subr.mxu0 0.0
        %1282 = vmatpush1.msra.mxu0 0.0
        %1283 = vmatprep.subr.mxu0 0.0
        %1284 = vmatpush1.msra.mxu0 0.0
        %1285 = vmatprep.subr.mxu0 0.0
        %1286 = vmatpush1.msra.mxu0 0.0
        %1287 = vmatprep.subr.mxu0 0.0
        %1288 = vmatpush1.msra.mxu0 0.0
        %1289 = vmatprep.subr.mxu0 0.0
        %1290 = vmatpush1.msra.mxu0 0.0
        %1291 = vmatprep.subr.mxu0 0.0
        %1292 = vmatpush1.msra.mxu0 0.0
        %1293 = vmatprep.subr.mxu0 0.0
        %1294 = vmatpush1.msra.mxu0 0.0
        %1295 = vmatprep.subr.mxu0 0.0
        %1296 = vmatpush1.msra.mxu0 %v1270
        %1297 = vmatprep.subr.mxu0 0.0
        %1298 = vmatpush1.msra.mxu0 %v1269
        %1299 = vmatprep.subr.mxu0 0.0
        %1300 = vmatpush1.msra.mxu0 %v1268
        %1301 = vmatprep.subr.mxu0 0.0
        %1302 = vmatpush1.msra.mxu0 %v1267
        %1303 = vmatprep.subr.mxu0 0.0
        %1304 = vmatpush1.msra.mxu0 %v1266
        %1305 = vmatprep.subr.mxu0 0.0
        %1306 = vmatpush1.msra.mxu0 %v1265
        %1307 = vmatprep.subr.mxu0 0.0
        %1308 = vmatpush1.msra.mxu0 %v1264
        %1309 = vmatprep.subr.mxu0 0.0
        %1310 = vmatpush1.msra.mxu0 %v1263
        %1311 = vmatprep.subr.mxu0 0.0
        %1312 = vmatpush2.msra.mxu0 0.0
        %1313 = vmatprep.subr.mxu0 0.0
        %1314 = vmatpush2.msra.mxu0 0.0
        %1315 = vmatprep.subr.mxu0 0.0
        %1316 = vmatpush2.msra.mxu0 0.0
        %1317 = vmatprep.subr.mxu0 0.0
        %1318 = vmatpush2.msra.mxu0 0.0
        %1319 = vmatprep.subr.mxu0 0.0
        %1320 = vmatpush2.msra.mxu0 0.0
        %1321 = vmatprep.subr.mxu0 0.0
        %1322 = vmatpush2.msra.mxu0 0.0
        %1323 = vmatprep.subr.mxu0 0.0
        %1324 = vmatpush2.msra.mxu0 0.0
        %1325 = vmatprep.subr.mxu0 0.0
        %1326 = vmatpush2.msra.mxu0 0.0
        %1327 = vmatprep.subr.mxu0 0.0
        %1328 = vmatpush2.msra.mxu0 0.0
        %1329 = vmatprep.subr.mxu0 0.0
        %1330 = vmatpush2.msra.mxu0 0.0
        %1331 = vmatprep.subr.mxu0 0.0
        %1332 = vmatpush2.msra.mxu0 0.0
        %1333 = vmatprep.subr.mxu0 0.0
        %1334 = vmatpush2.msra.mxu0 0.0
        %1335 = vmatprep.subr.mxu0 0.0
        %1336 = vmatpush2.msra.mxu0 0.0
        %1337 = vmatprep.subr.mxu0 0.0
        %1338 = vmatpush2.msra.mxu0 0.0
        %1339 = vmatprep.subr.mxu0 0.0
        %1340 = vmatpush2.msra.mxu0 0.0
        %1341 = vmatprep.subr.mxu0 0.0
        %1342 = vmatpush2.msra.mxu0 0.0
        %1343 = vmatprep.mubr.f32.mxu0 0.0
        %1344 = vmatmul.mubr.f32.gmra.mxu0 %v1277
        %v1345 = vpop.f32.mrf.mxu0
        %v1346 = vadd.f32 %v1274, %v1345
        %v1347 = vpop.f32.mrf.mxu0
        %1348 = vdwg.mxu0
        %v1349 = vadd.f32 %v1346, %v1184
        %v1350 = vsel %vm309, %v1349, 0.0
        %1351 = vadd.xlane.f32.xlu0 %v1350
        %v1352 = vpop.xlane.xlu0 %1351
        %v1353 = vmul.f32 %v1352, %v1164
        %v1354 = vsub.f32 %v1349, %v1353
        %v1355 = vmul.f32 %v1354, %v1354
        %v1356 = vsel %vm309, %v1355, 0.0
        %1357 = vadd.xlane.f32.xlu0 %v1356
        %v1358 = vpop.xlane.xlu0 %1357
        %v1359 = vmul.f32 %v1358, %v1164
        %v1360 = vadd.f32 %v1359, 1e-05
        %v1361 = vrsqrt.pop %v1360
        %v1362 = vmul.f32 %v1354, %v1361
        %v1363 = vlaneseq
        %v1364 = vshrl.u32 %v1363, 7
        %v1365 = vsub.s32 0, %v1364
        %v1366 = vrot.slane %v303, %v1365
        %v1367 = vmul.f32 %v1362, %v1366
        %v1368 = vlaneseq
        %v1369 = vshrl.u32 %v1368, 7
        %v1370 = vsub.s32 0, %v1369
        %v1371 = vrot.slane %v304, %v1370
        %v1372 = vadd.f32 %v1367, %v1371
        %1373 = vst.msk [vmem:[%s272] sm:$0xff] %vm309, %v1372
        %s1374 = sand.u32 %s148, 1
        %s1375 = scalar_lea.sflag [#allocation4], %s1374
        %s1376 = sand.u32 %s148, 1
        %s1377 = smul.addr %s1376, 8
        %s1378 = scalar_lea.vmem [#allocation5], %s1377
        %s1379 = sand.u32 %s174, 1
        %s1380 = scalar_lea.sflag [#allocation7], %s1379
        %s1381 = sand.u32 %s174, 1
        %s1382 = smul.addr %s1381, 32
        %s1383 = scalar_lea.vmem [#allocation6], %s1382
        // Predicated region
        $region45: #{tpu_custom_call.1} parent=39 // pred_check
          %p1384 = pneg %p158
        $region46: #{tpu_custom_call.1} parent=39 // pred_check_branch
          %1386 = sbr.rel (%p1384) target = $region48
        $region47: #{tpu_custom_call.1} parent=39 // pred_region
          %s1388 = ssub.s32 128, 128
          %1389 = vsyncadd %s1375, %s1388
          %s1390 = smul.addr %s25, 128
          %s1391 = scalar_lea.hbm %s5, %s1390
          %s1393 = sshll.u32 %s1378, 4
          %s1394 = int_to_ptr.vmem [resolvable:$true] %s1393
          %1396 = dma.vmem_to_hbm [thread:$0]  %s1394, 128, %s1391, %s1375
        $region48: #{tpu_custom_call.1} parent=39 // pred_fallthru
          _
        // Predicated region
        $region49: #{tpu_custom_call.1} parent=39 // pred_check
          %p1397 = pneg %p184
        $region50: #{tpu_custom_call.1} parent=39 // pred_check_branch
          %1399 = sbr.rel (%p1397) target = $region52
        $region51: #{tpu_custom_call.1} parent=39 // pred_region
          %s1401 = ssub.s32 512, 512
          %1402 = vsyncadd %s1380, %s1401
          %s1403 = smul.addr %s25, 4
          %s1404 = smul.addr %s1403, 128
          %s1405 = scalar_lea.hbm %s6, %s1404
          %s1406 = sshll.u32 %s1383, 4
          %s1407 = int_to_ptr.vmem [resolvable:$true] %s1406
          %1412 = dma.vmem_to_hbm [thread:$0]  %s1407, 512, %s1405, %s1380, 128, 128, 8
        $region52: #{tpu_custom_call.1} parent=39 // pred_fallthru
          _
      $region40: #{tpu_custom_call.1} parent=5 // pred_fallthru
        _
      %p1413 = scmp.le.s32.totalorder 2, %s20
      // Predicated region
      $region53: #{tpu_custom_call.1} parent=5 // pred_check
        %p1414 = pneg %p1413
      $region54: #{tpu_custom_call.1} parent=5 // pred_check_branch
        %1416 = sbr.rel (%p1414) target = $region56
      $region55: #{tpu_custom_call.1} parent=5 // pred_region
        %s1417 = ssub.s32 %s20, 2
        // Predicated region
        $region57: #{tpu_custom_call.1} parent=55 // pred_check
          %p1418 = pneg %p164
        $region58: #{tpu_custom_call.1} parent=55 // pred_check_branch
          %1420 = sbr.rel (%p1418) target = $region60
        $region59: #{tpu_custom_call.1} parent=55 // pred_region
          %s1421 = sand.u32 %s149, 1
          %s1422 = scalar_lea.sflag [#allocation4], %s1421
          %s1423 = sand.u32 %s149, 1
          %s1424 = smul.addr %s1423, 8
          %s1425 = scalar_lea.vmem [#allocation5], %s1424
          %1426 = dma.done %s1422, 128
        $region60: #{tpu_custom_call.1} parent=55 // pred_fallthru
          _
        // Predicated region
        $region61: #{tpu_custom_call.1} parent=55 // pred_check
          %p1427 = pneg %p190
        $region62: #{tpu_custom_call.1} parent=55 // pred_check_branch
          %1429 = sbr.rel (%p1427) target = $region64
        $region63: #{tpu_custom_call.1} parent=55 // pred_region
          %s1430 = sand.u32 %s175, 1
          %s1431 = scalar_lea.sflag [#allocation7], %s1430
          %s1432 = sand.u32 %s175, 1
          %s1433 = smul.addr %s1432, 32
          %s1434 = scalar_lea.vmem [#allocation6], %s1433
          %1435 = dma.done %s1431, 512
        $region64: #{tpu_custom_call.1} parent=55 // pred_fallthru
          _
      $region56: #{tpu_custom_call.1} parent=5 // pred_fallthru
        _
    $region6: #{tpu_custom_call.1} parent=1 // loop_footer
      %s24 = sadd.s32 1, %s20
    $region7: #{tpu_custom_call.1} parent=1 // loop_footer_branch
      %19 = sbr.rel target = $region3
    $region8: #{tpu_custom_call.1} parent=1 // loop_exit
      _
    %1436 = vsyncpa [#allocation3], 1
    %s1437 = scalar_lea.sflag [#allocation3], 1
    %1438 = vsyncpa %s1437, 1
    %1439 = vsyncpa [#allocation4], 1
    %s1440 = scalar_lea.sflag [#allocation4], 1
    %1441 = vsyncpa %s1440, 1
    %1442 = vsyncpa [#allocation7], 1
    %s1443 = scalar_lea.sflag [#allocation7], 1
    %1444 = vsyncpa %s1443, 1

</llo_original>
